<compile_context>
chip_gen: v7x
topology: tpu7x:2x2x1
jax: 0.10.0
libtpu: 0.0.40
codegen_flags: <defaults>
</compile_context>

<pallas_src>
import numpy as np
import jax
import jax.numpy as jnp
from jax.experimental import pallas as pl
from jax.experimental.pallas import tpu as pltpu

_LANE = 128


def _round_up(n, m):
    return ((n + m - 1) // m) * m


# ---------------------------------------------------------------------------
# Kernels
# ---------------------------------------------------------------------------
def _matmul_bias_kernel(x_ref, w_ref, b_ref, o_ref):
    """o = x @ w + b as one MXU matmul.  Used for the batched input projection
    (seq*batch rows at once) and for the output head, both hoisted out of the
    serial time loop."""
    o_ref[...] = (jnp.dot(x_ref[...], w_ref[...],
                          preferred_element_type=jnp.float32)
                  + b_ref[...])


def _lstm_recurrence_kernel(gx_ref, h0_ref, c0_ref, whh_ref,
                            hs_ref, hn_ref, cn_ref):
    """Serial LSTM recurrence (single invocation, unrolled time loop).

    gx_ref : (seq, batch, 4*HP)  precomputed x_t @ W_ih^T + (b_ih + b_hh),
                                 gate columns padded to HP = 128-multiple
    whh_ref: (HP, 4*HP)          recurrent weights, zero-padded rows/cols
    hs_ref : (seq, batch, HP)    per-step hidden states (consumed by the head)
    hn_ref, cn_ref : (batch, HP) final hidden / cell state
    """
    seq = gx_ref.shape[0]
    hp = h0_ref.shape[1]
    whh = whh_ref[...]            # loaded once, reused every step

    def step(t, carry):
        h, c = carry
        # Only the recurrent matmul remains on the critical path.
        gates = gx_ref[t] + jnp.dot(h, whh,
                                    preferred_element_type=jnp.float32)
        # 128-lane-aligned gate slices (PyTorch order i, f, g, o).
        i_g = jax.nn.sigmoid(gates[:, 0 * hp:1 * hp])
        f_g = jax.nn.sigmoid(gates[:, 1 * hp:2 * hp])
        g_g = jnp.tanh(gates[:, 2 * hp:3 * hp])
        o_g = jax.nn.sigmoid(gates[:, 3 * hp:4 * hp])
        c_new = f_g * c + i_g * g_g
        h_new = o_g * jnp.tanh(c_new)
        hs_ref[t] = h_new
        return h_new, c_new

    h_fin, c_fin = jax.lax.fori_loop(
        0, seq, step, (h0_ref[...], c0_ref[...]), unroll=True)
    hn_ref[...] = h_fin
    cn_ref[...] = c_fin


# ---------------------------------------------------------------------------
# pallas_call wrappers
# ---------------------------------------------------------------------------
_VMEM = pl.BlockSpec(memory_space=pltpu.MemorySpace.VMEM)


def _matmul_bias(x, w, b):
    m = x.shape[0]
    n = w.shape[1]
    return pl.pallas_call(
        _matmul_bias_kernel,
        in_specs=[_VMEM, _VMEM, _VMEM],
        out_specs=_VMEM,
        out_shape=jax.ShapeDtypeStruct((m, n), jnp.float32),
    )(x, w, b)


def _lstm_recurrence(gx3d, h0p, c0p, whh_pad):
    seq, batch, _ = gx3d.shape
    hp = h0p.shape[1]
    return pl.pallas_call(
        _lstm_recurrence_kernel,
        in_specs=[_VMEM, _VMEM, _VMEM, _VMEM],
        out_specs=(_VMEM, _VMEM, _VMEM),
        out_shape=(
            jax.ShapeDtypeStruct((seq, batch, hp), jnp.float32),
            jax.ShapeDtypeStruct((batch, hp), jnp.float32),
            jax.ShapeDtypeStruct((batch, hp), jnp.float32),
        ),
    )(gx3d, h0p, c0p, whh_pad)


@jax.jit
def lstm_forward(x, h0, c0, w_ih, w_hh, b_ih, b_hh, w_head, b_head):
    """Pallas equivalent of LSTM.forward.

    x:       (seq, batch, input_size)
    h0, c0:  (1, batch, hidden)
    w_ih:    (4*hidden, input_size)   w_hh: (4*hidden, hidden)
    b_ih, b_hh: (4*hidden,)
    w_head:  (output_size, hidden)    b_head: (output_size,)
    returns: prediction (seq, batch, output_size), h_n (1,B,H), c_n (1,B,H)
    """
    seq, batch, in_sz = x.shape
    hidden = h0.shape[-1]
    out_sz = w_head.shape[0]
    hp = _round_up(hidden, _LANE)          # per-gate lane-aligned width
    f32 = jnp.float32

    x2d = x.astype(f32).reshape(seq * batch, in_sz)
    h0p = jnp.pad(h0.reshape(batch, hidden).astype(f32),
                  ((0, 0), (0, hp - hidden)))
    c0p = jnp.pad(c0.reshape(batch, hidden).astype(f32),
                  ((0, 0), (0, hp - hidden)))

    def pad_gate_cols(w_t):                # (rows, 4*hidden) -> (rows, 4*hp)
        rows = w_t.shape[0]
        w4 = w_t.reshape(rows, 4, hidden)
        return jnp.pad(w4, ((0, 0), (0, 0), (0, hp - hidden))).reshape(rows, 4 * hp)

    wih_pad = pad_gate_cols(jnp.transpose(w_ih).astype(f32))      # (in, 4hp)
    whh_pad = pad_gate_cols(jnp.transpose(w_hh).astype(f32))      # (hidden, 4hp)
    whh_pad = jnp.pad(whh_pad, ((0, hp - hidden), (0, 0)))        # (hp, 4hp)
    b_pad = pad_gate_cols((b_ih + b_hh).astype(f32).reshape(1, 4 * hidden))
    whead_pad = jnp.pad(jnp.transpose(w_head).astype(f32),
                        ((0, hp - hidden), (0, 0)))               # (hp, out)
    bhead = b_head.astype(f32).reshape(1, out_sz)

    # 1) Input projection + fused bias for ALL time steps: one tall matmul.
    gx2d = _matmul_bias(x2d, wih_pad, b_pad)                      # (seq*B, 4hp)
    gx3d = gx2d.reshape(seq, batch, 4 * hp)

    # 2) Serial recurrence only (single kernel, unrolled time loop).
    hs, h_n, c_n = _lstm_recurrence(gx3d, h0p, c0p, whh_pad)

    # 3) Linear head over all time steps: one matmul.
    pred2d = _matmul_bias(hs.reshape(seq * batch, hp), whead_pad, bhead)
    pred = pred2d.reshape(seq, batch, out_sz)

    return (pred,
            h_n[:, :hidden].reshape(1, batch, hidden),
            c_n[:, :hidden].reshape(1, batch, hidden))


def _reference(x, h0, c0, w_ih, w_hh, b_ih, b_hh, w_head, b_head):
    """Pure-JAX reference matching PyTorch nn.LSTM semantics."""
    H = h0.shape[-1]

    def step(carry, x_t):
        h, c = carry
        gates = x_t @ w_ih.T + b_ih + h @ w_hh.T + b_hh
        i = jax.nn.sigmoid(gates[:, 0 * H:1 * H])
        f = jax.nn.sigmoid(gates[:, 1 * H:2 * H])
        g = jnp.tanh(gates[:, 2 * H:3 * H])
        o = jax.nn.sigmoid(gates[:, 3 * H:4 * H])
        c = f * c + i * g
        h = o * jnp.tanh(c)
        return (h, c), h

    (h, c), hs = jax.lax.scan(step, (h0[0], c0[0]), x)
    pred = hs @ w_head.T + b_head
    return pred, h[None], c[None]


if __name__ == "__main__":
    seq, batch, in_sz, hidden, out_sz = 8, 2, 11, 64, 1

    key = jax.random.PRNGKey(0)
    ks = jax.random.split(key, 9)
    s = 1.0 / np.sqrt(hidden)

    x = jax.random.normal(ks[0], (seq, batch, in_sz), jnp.float32)
    h0 = jax.random.normal(ks[1], (1, batch, hidden), jnp.float32)
    c0 = jax.random.normal(ks[2], (1, batch, hidden), jnp.float32)

    # PyTorch-style uniform(-1/sqrt(H), 1/sqrt(H)) parameter init.
    w_ih = jax.random.uniform(ks[3], (4 * hidden, in_sz), jnp.float32, -s, s)
    w_hh = jax.random.uniform(ks[4], (4 * hidden, hidden), jnp.float32, -s, s)
    b_ih = jax.random.uniform(ks[5], (4 * hidden,), jnp.float32, -s, s)
    b_hh = jax.random.uniform(ks[6], (4 * hidden,), jnp.float32, -s, s)
    w_head = jax.random.uniform(ks[7], (out_sz, hidden), jnp.float32, -s, s)
    b_head = jax.random.uniform(ks[8], (out_sz,), jnp.float32, -s, s)

    pred, h_n, c_n = lstm_forward(x, h0, c0, w_ih, w_hh, b_ih, b_hh,
                                  w_head, b_head)
    jax.block_until_ready((pred, h_n, c_n))

    pred_r, h_r, c_r = _reference(x, h0, c0, w_ih, w_hh, b_ih, b_hh,
                                  w_head, b_head)
    np.testing.assert_allclose(np.asarray(pred), np.asarray(pred_r),
                               rtol=1e-5, atol=1e-5)
    np.testing.assert_allclose(np.asarray(h_n), np.asarray(h_r),
                               rtol=1e-5, atol=1e-5)
    np.testing.assert_allclose(np.asarray(c_n), np.asarray(c_r),
                               rtol=1e-5, atol=1e-5)

    print("KERNEL_OK")
</pallas_src>

<mosaic_0001>
module attributes {stable_mosaic.version = 11 : i64} {
  func.func @_matmul_bias_kernel(%arg0: memref<16x11xf32, #tpu.memory_space<vmem>>, %arg1: memref<11x512xf32, #tpu.memory_space<vmem>>, %arg2: memref<1x512xf32, #tpu.memory_space<vmem>>, %arg3: memref<16x512xf32, #tpu.memory_space<vmem>>) attributes {dimension_semantics = [], scalar_prefetch = 0 : i64, scratch_operands = 0 : i64, tpu.core_type = #tpu.core_type<tc>} {
    %c0 = arith.constant 0 : index
    %c0_0 = arith.constant 0 : index
    %0 = vector.load %arg0[%c0, %c0_0] : memref<16x11xf32, #tpu.memory_space<vmem>>, vector<16x11xf32>
    %c0_1 = arith.constant 0 : index
    %c0_2 = arith.constant 0 : index
    %1 = vector.load %arg1[%c0_1, %c0_2] : memref<11x512xf32, #tpu.memory_space<vmem>>, vector<11x512xf32>
    %cst = arith.constant dense<0.000000e+00> : vector<16x512xf32>
    %2 = tpu.matmul %0, %1, %cst {dimension_numbers = #tpu.dot_dimension_numbers<[1], [0], [0], [1], [0, 0, 1, 1], [], []>} : vector<16x11xf32>, vector<11x512xf32>, vector<16x512xf32> -> vector<16x512xf32>
    %c0_3 = arith.constant 0 : index
    %c0_4 = arith.constant 0 : index
    %3 = vector.load %arg2[%c0_3, %c0_4] : memref<1x512xf32, #tpu.memory_space<vmem>>, vector<1x512xf32>
    %4 = vector.broadcast %3 : vector<1x512xf32> to vector<16x512xf32>
    %5 = arith.addf %2, %4 : vector<16x512xf32>
    %c0_5 = arith.constant 0 : index
    %c0_6 = arith.constant 0 : index
    %6 = vector.load %arg3[%c0_5, %c0_6] : memref<16x512xf32, #tpu.memory_space<vmem>>, vector<16x512xf32>
    tpu.vector_store %arg3[%c0_5, %c0_6], %5 {strides = array<i32>} : memref<16x512xf32, #tpu.memory_space<vmem>>, vector<16x512xf32>,
    return
  }
}

module attributes {stable_mosaic.version = 11 : i64} {
  func.func @_lstm_recurrence_kernel(%arg0: memref<8x2x512xf32, #tpu.memory_space<vmem>>, %arg1: memref<2x128xf32, #tpu.memory_space<vmem>>, %arg2: memref<2x128xf32, #tpu.memory_space<vmem>>, %arg3: memref<128x512xf32, #tpu.memory_space<vmem>>, %arg4: memref<8x2x128xf32, #tpu.memory_space<vmem>>, %arg5: memref<2x128xf32, #tpu.memory_space<vmem>>, %arg6: memref<2x128xf32, #tpu.memory_space<vmem>>) attributes {dimension_semantics = [], scalar_prefetch = 0 : i64, scratch_operands = 0 : i64, tpu.core_type = #tpu.core_type<tc>} {
    %c0 = arith.constant 0 : index
    %c0_0 = arith.constant 0 : index
    %0 = vector.load %arg3[%c0, %c0_0] : memref<128x512xf32, #tpu.memory_space<vmem>>, vector<128x512xf32>
    %c0_1 = arith.constant 0 : index
    %c0_2 = arith.constant 0 : index
    %1 = vector.load %arg1[%c0_1, %c0_2] : memref<2x128xf32, #tpu.memory_space<vmem>>, vector<2x128xf32>
    %c0_3 = arith.constant 0 : index
    %c0_4 = arith.constant 0 : index
    %2 = vector.load %arg2[%c0_3, %c0_4] : memref<2x128xf32, #tpu.memory_space<vmem>>, vector<2x128xf32>
    %c0_i32 = arith.constant 0 : i32
    %3 = arith.index_cast %c0_i32 : i32 to index
    %c0_5 = arith.constant 0 : index
    %c0_6 = arith.constant 0 : index
    %4 = vector.load %arg0[%3, %c0_5, %c0_6] : memref<8x2x512xf32, #tpu.memory_space<vmem>>, vector<1x2x512xf32>
    %5 = vector.shape_cast %4 : vector<1x2x512xf32> to vector<2x512xf32>
    %cst = arith.constant dense<0.000000e+00> : vector<2x512xf32>
    %6 = tpu.matmul %1, %0, %cst {dimension_numbers = #tpu.dot_dimension_numbers<[1], [0], [0], [1], [0, 0, 1, 1], [], []>} : vector<2x128xf32>, vector<128x512xf32>, vector<2x512xf32> -> vector<2x512xf32>
    %7 = arith.addf %5, %6 : vector<2x512xf32>
    %8 = vector.extract_strided_slice %7 {offsets = [0, 0], sizes = [2, 128], strides = [1, 1]} : vector<2x512xf32> to vector<2x128xf32>
    %9 = arith.negf %8 : vector<2x128xf32>
    %10 = math.exp %9 : vector<2x128xf32>
    %cst_7 = arith.constant 1.000000e+00 : f32
    %11 = vector.broadcast %cst_7 : f32 to vector<2x128xf32>
    %12 = arith.addf %11, %10 : vector<2x128xf32>
    %13 = arith.divf %11, %12 : vector<2x128xf32>
    %14 = vector.extract_strided_slice %7 {offsets = [0, 128], sizes = [2, 128], strides = [1, 1]} : vector<2x512xf32> to vector<2x128xf32>
    %15 = arith.negf %14 : vector<2x128xf32>
    %16 = math.exp %15 : vector<2x128xf32>
    %cst_8 = arith.constant 1.000000e+00 : f32
    %17 = vector.broadcast %cst_8 : f32 to vector<2x128xf32>
    %18 = arith.addf %17, %16 : vector<2x128xf32>
    %19 = arith.divf %17, %18 : vector<2x128xf32>
    %20 = vector.extract_strided_slice %7 {offsets = [0, 256], sizes = [2, 128], strides = [1, 1]} : vector<2x512xf32> to vector<2x128xf32>
    %21 = math.tanh %20 : vector<2x128xf32>
    %22 = vector.extract_strided_slice %7 {offsets = [0, 384], sizes = [2, 128], strides = [1, 1]} : vector<2x512xf32> to vector<2x128xf32>
    %23 = arith.negf %22 : vector<2x128xf32>
    %24 = math.exp %23 : vector<2x128xf32>
    %cst_9 = arith.constant 1.000000e+00 : f32
    %25 = vector.broadcast %cst_9 : f32 to vector<2x128xf32>
    %26 = arith.addf %25, %24 : vector<2x128xf32>
    %27 = arith.divf %25, %26 : vector<2x128xf32>
    %28 = arith.mulf %19, %2 : vector<2x128xf32>
    %29 = arith.mulf %13, %21 : vector<2x128xf32>
    %30 = arith.addf %28, %29 : vector<2x128xf32>
    %31 = math.tanh %30 : vector<2x128xf32>
    %32 = arith.mulf %27, %31 : vector<2x128xf32>
    %33 = arith.index_cast %c0_i32 : i32 to index
    %c0_10 = arith.constant 0 : index
    %c0_11 = arith.constant 0 : index
    %34 = vector.load %arg4[%33, %c0_10, %c0_11] : memref<8x2x128xf32, #tpu.memory_space<vmem>>, vector<1x2x128xf32>
    %35 = vector.shape_cast %34 : vector<1x2x128xf32> to vector<2x128xf32>
    %36 = vector.shape_cast %32 : vector<2x128xf32> to vector<1x2x128xf32>
    tpu.vector_store %arg4[%33, %c0_10, %c0_11], %36 {strides = array<i32>} : memref<8x2x128xf32, #tpu.memory_space<vmem>>, vector<1x2x128xf32>,
    %c1_i32 = arith.constant 1 : i32
    %37 = arith.index_cast %c1_i32 : i32 to index
    %c0_12 = arith.constant 0 : index
    %c0_13 = arith.constant 0 : index
    %38 = vector.load %arg0[%37, %c0_12, %c0_13] : memref<8x2x512xf32, #tpu.memory_space<vmem>>, vector<1x2x512xf32>
    %39 = vector.shape_cast %38 : vector<1x2x512xf32> to vector<2x512xf32>
    %cst_14 = arith.constant dense<0.000000e+00> : vector<2x512xf32>
    %40 = tpu.matmul %32, %0, %cst_14 {dimension_numbers = #tpu.dot_dimension_numbers<[1], [0], [0], [1], [0, 0, 1, 1], [], []>} : vector<2x128xf32>, vector<128x512xf32>, vector<2x512xf32> -> vector<2x512xf32>
    %41 = arith.addf %39, %40 : vector<2x512xf32>
    %42 = vector.extract_strided_slice %41 {offsets = [0, 0], sizes = [2, 128], strides = [1, 1]} : vector<2x512xf32> to vector<2x128xf32>
    %43 = arith.negf %42 : vector<2x128xf32>
    %44 = math.exp %43 : vector<2x128xf32>
    %cst_15 = arith.constant 1.000000e+00 : f32
    %45 = vector.broadcast %cst_15 : f32 to vector<2x128xf32>
    %46 = arith.addf %45, %44 : vector<2x128xf32>
    %47 = arith.divf %45, %46 : vector<2x128xf32>
    %48 = vector.extract_strided_slice %41 {offsets = [0, 128], sizes = [2, 128], strides = [1, 1]} : vector<2x512xf32> to vector<2x128xf32>
    %49 = arith.negf %48 : vector<2x128xf32>
    %50 = math.exp %49 : vector<2x128xf32>
    %cst_16 = arith.constant 1.000000e+00 : f32
    %51 = vector.broadcast %cst_16 : f32 to vector<2x128xf32>
    %52 = arith.addf %51, %50 : vector<2x128xf32>
    %53 = arith.divf %51, %52 : vector<2x128xf32>
    %54 = vector.extract_strided_slice %41 {offsets = [0, 256], sizes = [2, 128], strides = [1, 1]} : vector<2x512xf32> to vector<2x128xf32>
    %55 = math.tanh %54 : vector<2x128xf32>
    %56 = vector.extract_strided_slice %41 {offsets = [0, 384], sizes = [2, 128], strides = [1, 1]} : vector<2x512xf32> to vector<2x128xf32>
    %57 = arith.negf %56 : vector<2x128xf32>
    %58 = math.exp %57 : vector<2x128xf32>
    %cst_17 = arith.constant 1.000000e+00 : f32
    %59 = vector.broadcast %cst_17 : f32 to vector<2x128xf32>
    %60 = arith.addf %59, %58 : vector<2x128xf32>
    %61 = arith.divf %59, %60 : vector<2x128xf32>
    %62 = arith.mulf %53, %30 : vector<2x128xf32>
    %63 = arith.mulf %47, %55 : vector<2x128xf32>
    %64 = arith.addf %62, %63 : vector<2x128xf32>
    %65 = math.tanh %64 : vector<2x128xf32>
    %66 = arith.mulf %61, %65 : vector<2x128xf32>
    %67 = arith.index_cast %c1_i32 : i32 to index
    %c0_18 = arith.constant 0 : index
    %c0_19 = arith.constant 0 : index
    %68 = vector.load %arg4[%67, %c0_18, %c0_19] : memref<8x2x128xf32, #tpu.memory_space<vmem>>, vector<1x2x128xf32>
    %69 = vector.shape_cast %68 : vector<1x2x128xf32> to vector<2x128xf32>
    %70 = vector.shape_cast %66 : vector<2x128xf32> to vector<1x2x128xf32>
    tpu.vector_store %arg4[%67, %c0_18, %c0_19], %70 {strides = array<i32>} : memref<8x2x128xf32, #tpu.memory_space<vmem>>, vector<1x2x128xf32>,
    %c2_i32 = arith.constant 2 : i32
    %71 = arith.index_cast %c2_i32 : i32 to index
    %c0_20 = arith.constant 0 : index
    %c0_21 = arith.constant 0 : index
    %72 = vector.load %arg0[%71, %c0_20, %c0_21] : memref<8x2x512xf32, #tpu.memory_space<vmem>>, vector<1x2x512xf32>
    %73 = vector.shape_cast %72 : vector<1x2x512xf32> to vector<2x512xf32>
    %cst_22 = arith.constant dense<0.000000e+00> : vector<2x512xf32>
    %74 = tpu.matmul %66, %0, %cst_22 {dimension_numbers = #tpu.dot_dimension_numbers<[1], [0], [0], [1], [0, 0, 1, 1], [], []>} : vector<2x128xf32>, vector<128x512xf32>, vector<2x512xf32> -> vector<2x512xf32>
    %75 = arith.addf %73, %74 : vector<2x512xf32>
    %76 = vector.extract_strided_slice %75 {offsets = [0, 0], sizes = [2, 128], strides = [1, 1]} : vector<2x512xf32> to vector<2x128xf32>
    %77 = arith.negf %76 : vector<2x128xf32>
    %78 = math.exp %77 : vector<2x128xf32>
    %cst_23 = arith.constant 1.000000e+00 : f32
    %79 = vector.broadcast %cst_23 : f32 to vector<2x128xf32>
    %80 = arith.addf %79, %78 : vector<2x128xf32>
    %81 = arith.divf %79, %80 : vector<2x128xf32>
    %82 = vector.extract_strided_slice %75 {offsets = [0, 128], sizes = [2, 128], strides = [1, 1]} : vector<2x512xf32> to vector<2x128xf32>
    %83 = arith.negf %82 : vector<2x128xf32>
    %84 = math.exp %83 : vector<2x128xf32>
    %cst_24 = arith.constant 1.000000e+00 : f32
    %85 = vector.broadcast %cst_24 : f32 to vector<2x128xf32>
    %86 = arith.addf %85, %84 : vector<2x128xf32>
    %87 = arith.divf %85, %86 : vector<2x128xf32>
    %88 = vector.extract_strided_slice %75 {offsets = [0, 256], sizes = [2, 128], strides = [1, 1]} : vector<2x512xf32> to vector<2x128xf32>
    %89 = math.tanh %88 : vector<2x128xf32>
    %90 = vector.extract_strided_slice %75 {offsets = [0, 384], sizes = [2, 128], strides = [1, 1]} : vector<2x512xf32> to vector<2x128xf32>
    %91 = arith.negf %90 : vector<2x128xf32>
    %92 = math.exp %91 : vector<2x128xf32>
    %cst_25 = arith.constant 1.000000e+00 : f32
    %93 = vector.broadcast %cst_25 : f32 to vector<2x128xf32>
    %94 = arith.addf %93, %92 : vector<2x128xf32>
    %95 = arith.divf %93, %94 : vector<2x128xf32>
    %96 = arith.mulf %87, %64 : vector<2x128xf32>
    %97 = arith.mulf %81, %89 : vector<2x128xf32>
    %98 = arith.addf %96, %97 : vector<2x128xf32>
    %99 = math.tanh %98 : vector<2x128xf32>
    %100 = arith.mulf %95, %99 : vector<2x128xf32>
    %101 = arith.index_cast %c2_i32 : i32 to index
    %c0_26 = arith.constant 0 : index
    %c0_27 = arith.constant 0 : index
    %102 = vector.load %arg4[%101, %c0_26, %c0_27] : memref<8x2x128xf32, #tpu.memory_space<vmem>>, vector<1x2x128xf32>
    %103 = vector.shape_cast %102 : vector<1x2x128xf32> to vector<2x128xf32>
    %104 = vector.shape_cast %100 : vector<2x128xf32> to vector<1x2x128xf32>
    tpu.vector_store %arg4[%101, %c0_26, %c0_27], %104 {strides = array<i32>} : memref<8x2x128xf32, #tpu.memory_space<vmem>>, vector<1x2x128xf32>,
    %c3_i32 = arith.constant 3 : i32
    %105 = arith.index_cast %c3_i32 : i32 to index
    %c0_28 = arith.constant 0 : index
    %c0_29 = arith.constant 0 : index
    %106 = vector.load %arg0[%105, %c0_28, %c0_29] : memref<8x2x512xf32, #tpu.memory_space<vmem>>, vector<1x2x512xf32>
    %107 = vector.shape_cast %106 : vector<1x2x512xf32> to vector<2x512xf32>
    %cst_30 = arith.constant dense<0.000000e+00> : vector<2x512xf32>
    %108 = tpu.matmul %100, %0, %cst_30 {dimension_numbers = #tpu.dot_dimension_numbers<[1], [0], [0], [1], [0, 0, 1, 1], [], []>} : vector<2x128xf32>, vector<128x512xf32>, vector<2x512xf32> -> vector<2x512xf32>
    %109 = arith.addf %107, %108 : vector<2x512xf32>
    %110 = vector.extract_strided_slice %109 {offsets = [0, 0], sizes = [2, 128], strides = [1, 1]} : vector<2x512xf32> to vector<2x128xf32>
    %111 = arith.negf %110 : vector<2x128xf32>
    %112 = math.exp %111 : vector<2x128xf32>
    %cst_31 = arith.constant 1.000000e+00 : f32
    %113 = vector.broadcast %cst_31 : f32 to vector<2x128xf32>
    %114 = arith.addf %113, %112 : vector<2x128xf32>
    %115 = arith.divf %113, %114 : vector<2x128xf32>
    %116 = vector.extract_strided_slice %109 {offsets = [0, 128], sizes = [2, 128], strides = [1, 1]} : vector<2x512xf32> to vector<2x128xf32>
    %117 = arith.negf %116 : vector<2x128xf32>
    %118 = math.exp %117 : vector<2x128xf32>
    %cst_32 = arith.constant 1.000000e+00 : f32
    %119 = vector.broadcast %cst_32 : f32 to vector<2x128xf32>
    %120 = arith.addf %119, %118 : vector<2x128xf32>
    %121 = arith.divf %119, %120 : vector<2x128xf32>
    %122 = vector.extract_strided_slice %109 {offsets = [0, 256], sizes = [2, 128], strides = [1, 1]} : vector<2x512xf32> to vector<2x128xf32>
    %123 = math.tanh %122 : vector<2x128xf32>
    %124 = vector.extract_strided_slice %109 {offsets = [0, 384], sizes = [2, 128], strides = [1, 1]} : vector<2x512xf32> to vector<2x128xf32>
    %125 = arith.negf %124 : vector<2x128xf32>
    %126 = math.exp %125 : vector<2x128xf32>
    %cst_33 = arith.constant 1.000000e+00 : f32
    %127 = vector.broadcast %cst_33 : f32 to vector<2x128xf32>
    %128 = arith.addf %127, %126 : vector<2x128xf32>
    %129 = arith.divf %127, %128 : vector<2x128xf32>
    %130 = arith.mulf %121, %98 : vector<2x128xf32>
    %131 = arith.mulf %115, %123 : vector<2x128xf32>
    %132 = arith.addf %130, %131 : vector<2x128xf32>
    %133 = math.tanh %132 : vector<2x128xf32>
    %134 = arith.mulf %129, %133 : vector<2x128xf32>
    %135 = arith.index_cast %c3_i32 : i32 to index
    %c0_34 = arith.constant 0 : index
    %c0_35 = arith.constant 0 : index
    %136 = vector.load %arg4[%135, %c0_34, %c0_35] : memref<8x2x128xf32, #tpu.memory_space<vmem>>, vector<1x2x128xf32>
    %137 = vector.shape_cast %136 : vector<1x2x128xf32> to vector<2x128xf32>
    %138 = vector.shape_cast %134 : vector<2x128xf32> to vector<1x2x128xf32>
    tpu.vector_store %arg4[%135, %c0_34, %c0_35], %138 {strides = array<i32>} : memref<8x2x128xf32, #tpu.memory_space<vmem>>, vector<1x2x128xf32>,
    %c4_i32 = arith.constant 4 : i32
    %139 = arith.index_cast %c4_i32 : i32 to index
    %c0_36 = arith.constant 0 : index
    %c0_37 = arith.constant 0 : index
    %140 = vector.load %arg0[%139, %c0_36, %c0_37] : memref<8x2x512xf32, #tpu.memory_space<vmem>>, vector<1x2x512xf32>
    %141 = vector.shape_cast %140 : vector<1x2x512xf32> to vector<2x512xf32>
    %cst_38 = arith.constant dense<0.000000e+00> : vector<2x512xf32>
    %142 = tpu.matmul %134, %0, %cst_38 {dimension_numbers = #tpu.dot_dimension_numbers<[1], [0], [0], [1], [0, 0, 1, 1], [], []>} : vector<2x128xf32>, vector<128x512xf32>, vector<2x512xf32> -> vector<2x512xf32>
    %143 = arith.addf %141, %142 : vector<2x512xf32>
    %144 = vector.extract_strided_slice %143 {offsets = [0, 0], sizes = [2, 128], strides = [1, 1]} : vector<2x512xf32> to vector<2x128xf32>
    %145 = arith.negf %144 : vector<2x128xf32>
    %146 = math.exp %145 : vector<2x128xf32>
    %cst_39 = arith.constant 1.000000e+00 : f32
    %147 = vector.broadcast %cst_39 : f32 to vector<2x128xf32>
    %148 = arith.addf %147, %146 : vector<2x128xf32>
    %149 = arith.divf %147, %148 : vector<2x128xf32>
    %150 = vector.extract_strided_slice %143 {offsets = [0, 128], sizes = [2, 128], strides = [1, 1]} : vector<2x512xf32> to vector<2x128xf32>
    %151 = arith.negf %150 : vector<2x128xf32>
    %152 = math.exp %151 : vector<2x128xf32>
    %cst_40 = arith.constant 1.000000e+00 : f32
    %153 = vector.broadcast %cst_40 : f32 to vector<2x128xf32>
    %154 = arith.addf %153, %152 : vector<2x128xf32>
    %155 = arith.divf %153, %154 : vector<2x128xf32>
    %156 = vector.extract_strided_slice %143 {offsets = [0, 256], sizes = [2, 128], strides = [1, 1]} : vector<2x512xf32> to vector<2x128xf32>
    %157 = math.tanh %156 : vector<2x128xf32>
    %158 = vector.extract_strided_slice %143 {offsets = [0, 384], sizes = [2, 128], strides = [1, 1]} : vector<2x512xf32> to vector<2x128xf32>
    %159 = arith.negf %158 : vector<2x128xf32>
    %160 = math.exp %159 : vector<2x128xf32>
    %cst_41 = arith.constant 1.000000e+00 : f32
    %161 = vector.broadcast %cst_41 : f32 to vector<2x128xf32>
    %162 = arith.addf %161, %160 : vector<2x128xf32>
    %163 = arith.divf %161, %162 : vector<2x128xf32>
    %164 = arith.mulf %155, %132 : vector<2x128xf32>
    %165 = arith.mulf %149, %157 : vector<2x128xf32>
    %166 = arith.addf %164, %165 : vector<2x128xf32>
    %167 = math.tanh %166 : vector<2x128xf32>
    %168 = arith.mulf %163, %167 : vector<2x128xf32>
    %169 = arith.index_cast %c4_i32 : i32 to index
    %c0_42 = arith.constant 0 : index
    %c0_43 = arith.constant 0 : index
    %170 = vector.load %arg4[%169, %c0_42, %c0_43] : memref<8x2x128xf32, #tpu.memory_space<vmem>>, vector<1x2x128xf32>
    %171 = vector.shape_cast %170 : vector<1x2x128xf32> to vector<2x128xf32>
    %172 = vector.shape_cast %168 : vector<2x128xf32> to vector<1x2x128xf32>
    tpu.vector_store %arg4[%169, %c0_42, %c0_43], %172 {strides = array<i32>} : memref<8x2x128xf32, #tpu.memory_space<vmem>>, vector<1x2x128xf32>,
    %c5_i32 = arith.constant 5 : i32
    %173 = arith.index_cast %c5_i32 : i32 to index
    %c0_44 = arith.constant 0 : index
    %c0_45 = arith.constant 0 : index
    %174 = vector.load %arg0[%173, %c0_44, %c0_45] : memref<8x2x512xf32, #tpu.memory_space<vmem>>, vector<1x2x512xf32>
    %175 = vector.shape_cast %174 : vector<1x2x512xf32> to vector<2x512xf32>
    %cst_46 = arith.constant dense<0.000000e+00> : vector<2x512xf32>
    %176 = tpu.matmul %168, %0, %cst_46 {dimension_numbers = #tpu.dot_dimension_numbers<[1], [0], [0], [1], [0, 0, 1, 1], [], []>} : vector<2x128xf32>, vector<128x512xf32>, vector<2x512xf32> -> vector<2x512xf32>
    %177 = arith.addf %175, %176 : vector<2x512xf32>
    %178 = vector.extract_strided_slice %177 {offsets = [0, 0], sizes = [2, 128], strides = [1, 1]} : vector<2x512xf32> to vector<2x128xf32>
    %179 = arith.negf %178 : vector<2x128xf32>
    %180 = math.exp %179 : vector<2x128xf32>
    %cst_47 = arith.constant 1.000000e+00 : f32
    %181 = vector.broadcast %cst_47 : f32 to vector<2x128xf32>
    %182 = arith.addf %181, %180 : vector<2x128xf32>
    %183 = arith.divf %181, %182 : vector<2x128xf32>
    %184 = vector.extract_strided_slice %177 {offsets = [0, 128], sizes = [2, 128], strides = [1, 1]} : vector<2x512xf32> to vector<2x128xf32>
    %185 = arith.negf %184 : vector<2x128xf32>
    %186 = math.exp %185 : vector<2x128xf32>
    %cst_48 = arith.constant 1.000000e+00 : f32
    %187 = vector.broadcast %cst_48 : f32 to vector<2x128xf32>
    %188 = arith.addf %187, %186 : vector<2x128xf32>
    %189 = arith.divf %187, %188 : vector<2x128xf32>
    %190 = vector.extract_strided_slice %177 {offsets = [0, 256], sizes = [2, 128], strides = [1, 1]} : vector<2x512xf32> to vector<2x128xf32>
    %191 = math.tanh %190 : vector<2x128xf32>
    %192 = vector.extract_strided_slice %177 {offsets = [0, 384], sizes = [2, 128], strides = [1, 1]} : vector<2x512xf32> to vector<2x128xf32>
    %193 = arith.negf %192 : vector<2x128xf32>
    %194 = math.exp %193 : vector<2x128xf32>
    %cst_49 = arith.constant 1.000000e+00 : f32
    %195 = vector.broadcast %cst_49 : f32 to vector<2x128xf32>
    %196 = arith.addf %195, %194 : vector<2x128xf32>
    %197 = arith.divf %195, %196 : vector<2x128xf32>
    %198 = arith.mulf %189, %166 : vector<2x128xf32>
    %199 = arith.mulf %183, %191 : vector<2x128xf32>
    %200 = arith.addf %198, %199 : vector<2x128xf32>
    %201 = math.tanh %200 : vector<2x128xf32>
    %202 = arith.mulf %197, %201 : vector<2x128xf32>
    %203 = arith.index_cast %c5_i32 : i32 to index
    %c0_50 = arith.constant 0 : index
    %c0_51 = arith.constant 0 : index
    %204 = vector.load %arg4[%203, %c0_50, %c0_51] : memref<8x2x128xf32, #tpu.memory_space<vmem>>, vector<1x2x128xf32>
    %205 = vector.shape_cast %204 : vector<1x2x128xf32> to vector<2x128xf32>
    %206 = vector.shape_cast %202 : vector<2x128xf32> to vector<1x2x128xf32>
    tpu.vector_store %arg4[%203, %c0_50, %c0_51], %206 {strides = array<i32>} : memref<8x2x128xf32, #tpu.memory_space<vmem>>, vector<1x2x128xf32>,
    %c6_i32 = arith.constant 6 : i32
    %207 = arith.index_cast %c6_i32 : i32 to index
    %c0_52 = arith.constant 0 : index
    %c0_53 = arith.constant 0 : index
    %208 = vector.load %arg0[%207, %c0_52, %c0_53] : memref<8x2x512xf32, #tpu.memory_space<vmem>>, vector<1x2x512xf32>
    %209 = vector.shape_cast %208 : vector<1x2x512xf32> to vector<2x512xf32>
    %cst_54 = arith.constant dense<0.000000e+00> : vector<2x512xf32>
    %210 = tpu.matmul %202, %0, %cst_54 {dimension_numbers = #tpu.dot_dimension_numbers<[1], [0], [0], [1], [0, 0, 1, 1], [], []>} : vector<2x128xf32>, vector<128x512xf32>, vector<2x512xf32> -> vector<2x512xf32>
    %211 = arith.addf %209, %210 : vector<2x512xf32>
    %212 = vector.extract_strided_slice %211 {offsets = [0, 0], sizes = [2, 128], strides = [1, 1]} : vector<2x512xf32> to vector<2x128xf32>
    %213 = arith.negf %212 : vector<2x128xf32>
    %214 = math.exp %213 : vector<2x128xf32>
    %cst_55 = arith.constant 1.000000e+00 : f32
    %215 = vector.broadcast %cst_55 : f32 to vector<2x128xf32>
    %216 = arith.addf %215, %214 : vector<2x128xf32>
    %217 = arith.divf %215, %216 : vector<2x128xf32>
    %218 = vector.extract_strided_slice %211 {offsets = [0, 128], sizes = [2, 128], strides = [1, 1]} : vector<2x512xf32> to vector<2x128xf32>
    %219 = arith.negf %218 : vector<2x128xf32>
    %220 = math.exp %219 : vector<2x128xf32>
    %cst_56 = arith.constant 1.000000e+00 : f32
    %221 = vector.broadcast %cst_56 : f32 to vector<2x128xf32>
    %222 = arith.addf %221, %220 : vector<2x128xf32>
    %223 = arith.divf %221, %222 : vector<2x128xf32>
    %224 = vector.extract_strided_slice %211 {offsets = [0, 256], sizes = [2, 128], strides = [1, 1]} : vector<2x512xf32> to vector<2x128xf32>
    %225 = math.tanh %224 : vector<2x128xf32>
    %226 = vector.extract_strided_slice %211 {offsets = [0, 384], sizes = [2, 128], strides = [1, 1]} : vector<2x512xf32> to vector<2x128xf32>
    %227 = arith.negf %226 : vector<2x128xf32>
    %228 = math.exp %227 : vector<2x128xf32>
    %cst_57 = arith.constant 1.000000e+00 : f32
    %229 = vector.broadcast %cst_57 : f32 to vector<2x128xf32>
    %230 = arith.addf %229, %228 : vector<2x128xf32>
    %231 = arith.divf %229, %230 : vector<2x128xf32>
    %232 = arith.mulf %223, %200 : vector<2x128xf32>
    %233 = arith.mulf %217, %225 : vector<2x128xf32>
    %234 = arith.addf %232, %233 : vector<2x128xf32>
    %235 = math.tanh %234 : vector<2x128xf32>
    %236 = arith.mulf %231, %235 : vector<2x128xf32>
    %237 = arith.index_cast %c6_i32 : i32 to index
    %c0_58 = arith.constant 0 : index
    %c0_59 = arith.constant 0 : index
    %238 = vector.load %arg4[%237, %c0_58, %c0_59] : memref<8x2x128xf32, #tpu.memory_space<vmem>>, vector<1x2x128xf32>
    %239 = vector.shape_cast %238 : vector<1x2x128xf32> to vector<2x128xf32>
    %240 = vector.shape_cast %236 : vector<2x128xf32> to vector<1x2x128xf32>
    tpu.vector_store %arg4[%237, %c0_58, %c0_59], %240 {strides = array<i32>} : memref<8x2x128xf32, #tpu.memory_space<vmem>>, vector<1x2x128xf32>,
    %c7_i32 = arith.constant 7 : i32
    %241 = arith.index_cast %c7_i32 : i32 to index
    %c0_60 = arith.constant 0 : index
    %c0_61 = arith.constant 0 : index
    %242 = vector.load %arg0[%241, %c0_60, %c0_61] : memref<8x2x512xf32, #tpu.memory_space<vmem>>, vector<1x2x512xf32>
    %243 = vector.shape_cast %242 : vector<1x2x512xf32> to vector<2x512xf32>
    %cst_62 = arith.constant dense<0.000000e+00> : vector<2x512xf32>
    %244 = tpu.matmul %236, %0, %cst_62 {dimension_numbers = #tpu.dot_dimension_numbers<[1], [0], [0], [1], [0, 0, 1, 1], [], []>} : vector<2x128xf32>, vector<128x512xf32>, vector<2x512xf32> -> vector<2x512xf32>
    %245 = arith.addf %243, %244 : vector<2x512xf32>
    %246 = vector.extract_strided_slice %245 {offsets = [0, 0], sizes = [2, 128], strides = [1, 1]} : vector<2x512xf32> to vector<2x128xf32>
    %247 = arith.negf %246 : vector<2x128xf32>
    %248 = math.exp %247 : vector<2x128xf32>
    %cst_63 = arith.constant 1.000000e+00 : f32
    %249 = vector.broadcast %cst_63 : f32 to vector<2x128xf32>
    %250 = arith.addf %249, %248 : vector<2x128xf32>
    %251 = arith.divf %249, %250 : vector<2x128xf32>
    %252 = vector.extract_strided_slice %245 {offsets = [0, 128], sizes = [2, 128], strides = [1, 1]} : vector<2x512xf32> to vector<2x128xf32>
    %253 = arith.negf %252 : vector<2x128xf32>
    %254 = math.exp %253 : vector<2x128xf32>
    %cst_64 = arith.constant 1.000000e+00 : f32
    %255 = vector.broadcast %cst_64 : f32 to vector<2x128xf32>
    %256 = arith.addf %255, %254 : vector<2x128xf32>
    %257 = arith.divf %255, %256 : vector<2x128xf32>
    %258 = vector.extract_strided_slice %245 {offsets = [0, 256], sizes = [2, 128], strides = [1, 1]} : vector<2x512xf32> to vector<2x128xf32>
    %259 = math.tanh %258 : vector<2x128xf32>
    %260 = vector.extract_strided_slice %245 {offsets = [0, 384], sizes = [2, 128], strides = [1, 1]} : vector<2x512xf32> to vector<2x128xf32>
    %261 = arith.negf %260 : vector<2x128xf32>
    %262 = math.exp %261 : vector<2x128xf32>
    %cst_65 = arith.constant 1.000000e+00 : f32
    %263 = vector.broadcast %cst_65 : f32 to vector<2x128xf32>
    %264 = arith.addf %263, %262 : vector<2x128xf32>
    %265 = arith.divf %263, %264 : vector<2x128xf32>
    %266 = arith.mulf %257, %234 : vector<2x128xf32>
    %267 = arith.mulf %251, %259 : vector<2x128xf32>
    %268 = arith.addf %266, %267 : vector<2x128xf32>
    %269 = math.tanh %268 : vector<2x128xf32>
    %270 = arith.mulf %265, %269 : vector<2x128xf32>
    %271 = arith.index_cast %c7_i32 : i32 to index
    %c0_66 = arith.constant 0 : index
    %c0_67 = arith.constant 0 : index
    %272 = vector.load %arg4[%271, %c0_66, %c0_67] : memref<8x2x128xf32, #tpu.memory_space<vmem>>, vector<1x2x128xf32>
    %273 = vector.shape_cast %272 : vector<1x2x128xf32> to vector<2x128xf32>
    %274 = vector.shape_cast %270 : vector<2x128xf32> to vector<1x2x128xf32>
    tpu.vector_store %arg4[%271, %c0_66, %c0_67], %274 {strides = array<i32>} : memref<8x2x128xf32, #tpu.memory_space<vmem>>, vector<1x2x128xf32>,
    %c8_i32 = arith.constant 8 : i32
    %c0_68 = arith.constant 0 : index
    %c0_69 = arith.constant 0 : index
    %275 = vector.load %arg5[%c0_68, %c0_69] : memref<2x128xf32, #tpu.memory_space<vmem>>, vector<2x128xf32>
    tpu.vector_store %arg5[%c0_68, %c0_69], %270 {strides = array<i32>} : memref<2x128xf32, #tpu.memory_space<vmem>>, vector<2x128xf32>,
    %c0_70 = arith.constant 0 : index
    %c0_71 = arith.constant 0 : index
    %276 = vector.load %arg6[%c0_70, %c0_71] : memref<2x128xf32, #tpu.memory_space<vmem>>, vector<2x128xf32>
    tpu.vector_store %arg6[%c0_70, %c0_71], %268 {strides = array<i32>} : memref<2x128xf32, #tpu.memory_space<vmem>>, vector<2x128xf32>,
    return
  }
}

module attributes {stable_mosaic.version = 11 : i64} {
  func.func @_matmul_bias_kernel(%arg0: memref<16x128xf32, #tpu.memory_space<vmem>>, %arg1: memref<128x1xf32, #tpu.memory_space<vmem>>, %arg2: memref<1x1xf32, #tpu.memory_space<vmem>>, %arg3: memref<16x1xf32, #tpu.memory_space<vmem>>) attributes {dimension_semantics = [], scalar_prefetch = 0 : i64, scratch_operands = 0 : i64, tpu.core_type = #tpu.core_type<tc>} {
    %c0 = arith.constant 0 : index
    %c0_0 = arith.constant 0 : index
    %0 = vector.load %arg0[%c0, %c0_0] : memref<16x128xf32, #tpu.memory_space<vmem>>, vector<16x128xf32>
    %c0_1 = arith.constant 0 : index
    %c0_2 = arith.constant 0 : index
    %1 = vector.load %arg1[%c0_1, %c0_2] : memref<128x1xf32, #tpu.memory_space<vmem>>, vector<128x1xf32>
    %cst = arith.constant dense<0.000000e+00> : vector<16x1xf32>
    %2 = tpu.matmul %0, %1, %cst {dimension_numbers = #tpu.dot_dimension_numbers<[1], [0], [0], [1], [0, 0, 1, 1], [], []>} : vector<16x128xf32>, vector<128x1xf32>, vector<16x1xf32> -> vector<16x1xf32>
    %c0_3 = arith.constant 0 : index
    %c0_4 = arith.constant 0 : index
    %3 = vector.load %arg2[%c0_3, %c0_4] : memref<1x1xf32, #tpu.memory_space<vmem>>, vector<1x1xf32>
    %4 = vector.broadcast %3 : vector<1x1xf32> to vector<16x1xf32>
    %5 = arith.addf %2, %4 : vector<16x1xf32>
    %c0_5 = arith.constant 0 : index
    %c0_6 = arith.constant 0 : index
    %6 = vector.load %arg3[%c0_5, %c0_6] : memref<16x1xf32, #tpu.memory_space<vmem>>, vector<16x1xf32>
    tpu.vector_store %arg3[%c0_5, %c0_6], %5 {strides = array<i32>} : memref<16x1xf32, #tpu.memory_space<vmem>>, vector<16x1xf32>,
    return
  }
}

</mosaic_0001>

<llo_original>
// kernel: lstm_forward.5
$region0: #{lstm_forward.5}
  #allocation0 [shape = 'u32[]', space=smem, size = 0x4, offset = 0x4, fixed_abs, tag = 'smem constant byte address 0x4 - core index']
  #allocation1 [shape = 'u32[144,128]{1,0:T(1,128)}', space=vmem, size = 0x12000, scoped, tag = 'internal scratch']
  #allocation2 [shape = 'f32[1,1]{1,0:T(1,128)S(1)}', space=vmem, size = 0x200, scoped, tag = 'scoped memory for lstm_forward.5']
  %s0 = inlined_call_operand.vmem [shape: f32[16,128], index: 0, kind: input, shape index: {}]
  %s1 = inlined_call_operand.vmem [shape: f32[128,1], index: 1, kind: input, shape index: {}]
  %s2 = inlined_call_operand.<no memory space> [shape: f32[1,1], index: 2, kind: input, shape index: {}]
  %s3 = inlined_call_operand.vmem [shape: f32[16,1], index: 3, kind: output, shape index: {}]
  %s4 = sld [smem:[#allocation0]]
  $region22: #{lstm_forward.5} parent=0
    _
  %s6 = ssub.s32 1, %s4
  %s7 = scalar_select 0, %s6, %s4
  %v8 = vstv %s2
  %9 = vst [vmem:[#allocation2] sm:$0x1] %v8
  // Predicated region
  $region2: #{lstm_forward.5} parent=0 // pred_check
    _
  $region3: #{lstm_forward.5} parent=0 // pred_check_branch
    %11 = sbr.rel (0) target = $region5
  $region4: #{lstm_forward.5} parent=0 // pred_region
    _
  $region5: #{lstm_forward.5} parent=0 // pred_fallthru
    _
  // Predicated region
  $region6: #{lstm_forward.5} parent=0 // pred_check
    _
  $region7: #{lstm_forward.5} parent=0 // pred_check_branch
    %13 = sbr.rel (0) target = $region9
  $region8: #{lstm_forward.5} parent=0 // pred_region
    _
  $region9: #{lstm_forward.5} parent=0 // pred_fallthru
    _
  // Predicated region
  $region10: #{lstm_forward.5} parent=0 // pred_check
    _
  $region11: #{lstm_forward.5} parent=0 // pred_check_branch
    %15 = sbr.rel (0) target = $region13
  $region12: #{lstm_forward.5} parent=0 // pred_region
    _
  $region13: #{lstm_forward.5} parent=0 // pred_fallthru
    _
  %v16 = vld [vmem:[%s0] sm:$0xff]
  %v17 = vld [vmem:[%s0 + $0x8] sm:$0xff]
  %v18 = vld [vmem:[%s1] sm:$0xff]
  %v19 = vld [vmem:[%s1 + $0x8] sm:$0xff]
  %v20 = vld [vmem:[%s1 + $0x10] sm:$0xff]
  %v21 = vld [vmem:[%s1 + $0x18] sm:$0xff]
  %v22 = vld [vmem:[%s1 + $0x20] sm:$0xff]
  %v23 = vld [vmem:[%s1 + $0x28] sm:$0xff]
  %v24 = vld [vmem:[%s1 + $0x30] sm:$0xff]
  %v25 = vld [vmem:[%s1 + $0x38] sm:$0xff]
  %v26 = vld [vmem:[%s1 + $0x40] sm:$0xff]
  %v27 = vld [vmem:[%s1 + $0x48] sm:$0xff]
  %v28 = vld [vmem:[%s1 + $0x50] sm:$0xff]
  %v29 = vld [vmem:[%s1 + $0x58] sm:$0xff]
  %v30 = vld [vmem:[%s1 + $0x60] sm:$0xff]
  %v31 = vld [vmem:[%s1 + $0x68] sm:$0xff]
  %v32 = vld [vmem:[%s1 + $0x70] sm:$0xff]
  %v33 = vld [vmem:[%s1 + $0x78] sm:$0xff]
  %v34 = vld [vmem:[#allocation2] sm:$0x1]
  %v36 = vlaneseq
  %v37 = vshrl.u32 %v36, 7
  %v38 = vsub.s32 0, %v37
  %v39 = vrot.slane %v34, %v38
  %41 = vmatprep.subr.mxu0 0.0
  %42 = vmatpush1.msra.mxu0 %v18
  %43 = vmatprep.subr.mxu0 0.0
  %44 = vmatpush1.msra.mxu0 %v19
  %45 = vmatprep.subr.mxu0 0.0
  %46 = vmatpush1.msra.mxu0 %v20
  %47 = vmatprep.subr.mxu0 0.0
  %48 = vmatpush1.msra.mxu0 %v21
  %49 = vmatprep.subr.mxu0 0.0
  %50 = vmatpush1.msra.mxu0 %v22
  %51 = vmatprep.subr.mxu0 0.0
  %52 = vmatpush1.msra.mxu0 %v23
  %53 = vmatprep.subr.mxu0 0.0
  %54 = vmatpush1.msra.mxu0 %v24
  %55 = vmatprep.subr.mxu0 0.0
  %56 = vmatpush1.msra.mxu0 %v25
  %57 = vmatprep.subr.mxu0 0.0
  %58 = vmatpush1.msra.mxu0 %v26
  %59 = vmatprep.subr.mxu0 0.0
  %60 = vmatpush1.msra.mxu0 %v27
  %61 = vmatprep.subr.mxu0 0.0
  %62 = vmatpush1.msra.mxu0 %v28
  %63 = vmatprep.subr.mxu0 0.0
  %64 = vmatpush1.msra.mxu0 %v29
  %65 = vmatprep.subr.mxu0 0.0
  %66 = vmatpush1.msra.mxu0 %v30
  %67 = vmatprep.subr.mxu0 0.0
  %68 = vmatpush1.msra.mxu0 %v31
  %69 = vmatprep.subr.mxu0 0.0
  %70 = vmatpush1.msra.mxu0 %v32
  %71 = vmatprep.subr.mxu0 0.0
  %72 = vmatpush1.msra.mxu0 %v33
  %73 = vmatprep.subr.mxu0 0.0
  %74 = vmatpush1.msra.mxu0 0.0
  %75 = vmatprep.subr.mxu0 0.0
  %76 = vmatpush1.msra.mxu0 0.0
  %77 = vmatprep.subr.mxu0 0.0
  %78 = vmatpush1.msra.mxu0 0.0
  %79 = vmatprep.subr.mxu0 0.0
  %80 = vmatpush1.msra.mxu0 0.0
  %81 = vmatprep.subr.mxu0 0.0
  %82 = vmatpush1.msra.mxu0 0.0
  %83 = vmatprep.subr.mxu0 0.0
  %84 = vmatpush1.msra.mxu0 0.0
  %85 = vmatprep.subr.mxu0 0.0
  %86 = vmatpush1.msra.mxu0 0.0
  %87 = vmatprep.subr.mxu0 0.0
  %88 = vmatpush1.msra.mxu0 0.0
  %89 = vmatprep.subr.mxu0 0.0
  %90 = vmatpush1.msra.mxu0 0.0
  %91 = vmatprep.subr.mxu0 0.0
  %92 = vmatpush1.msra.mxu0 0.0
  %93 = vmatprep.subr.mxu0 0.0
  %94 = vmatpush1.msra.mxu0 0.0
  %95 = vmatprep.subr.mxu0 0.0
  %96 = vmatpush1.msra.mxu0 0.0
  %97 = vmatprep.subr.mxu0 0.0
  %98 = vmatpush1.msra.mxu0 0.0
  %99 = vmatprep.subr.mxu0 0.0
  %100 = vmatpush1.msra.mxu0 0.0
  %101 = vmatprep.subr.mxu0 0.0
  %102 = vmatpush1.msra.mxu0 0.0
  %103 = vmatprep.subr.mxu0 0.0
  %104 = vmatpush1.msra.mxu0 0.0
  %105 = vmatprep.mubr.f32.mxu0 0.0
  %106 = vmatmul.mubr.f32.gmra.mrb[0].mxu0 %v16
  %v107 = vpop.f32.mrb[0].mxu0
  %v108 = vadd.f32 %v39, %v107
  %v109 = vpop.f32.mrb[0].mxu0
  %110 = vmatprep.mubr.f32.mxu0 0.0
  %111 = vmatmul.mubr.f32.gmra.mrb[0].mxu0 %v17
  %v112 = vpop.f32.mrb[0].mxu0
  %v113 = vadd.f32 %v39, %v112
  %v114 = vpop.f32.mrb[0].mxu0
  %115 = vdwg.mxu0
  %vm116 = vcmask 7168
  %117 = vst.msk [vmem:[%s3] sm:$0xff] %vm116, %v108
  %118 = vst.msk [vmem:[%s3 + $0x8] sm:$0xff] %vm116, %v113
  // Predicated region
  $region14: #{lstm_forward.5} parent=0 // pred_check
    _
  $region15: #{lstm_forward.5} parent=0 // pred_check_branch
    %120 = sbr.rel (0) target = $region17
  $region16: #{lstm_forward.5} parent=0 // pred_region
    _
  $region17: #{lstm_forward.5} parent=0 // pred_fallthru
    _
  // Predicated region
  $region18: #{lstm_forward.5} parent=0 // pred_check
    _
  $region19: #{lstm_forward.5} parent=0 // pred_check_branch
    %122 = sbr.rel (0) target = $region21
  $region20: #{lstm_forward.5} parent=0 // pred_region
    _
  $region21: #{lstm_forward.5} parent=0 // pred_fallthru
    _

// kernel: lstm_forward.3
$region0: #{lstm_forward.3}
  #allocation0 [shape = 'u32[]', space=smem, size = 0x4, offset = 0x4, fixed_abs, tag = 'smem constant byte address 0x4 - core index']
  #allocation1 [shape = 'u32[144,128]{1,0:T(1,128)}', space=vmem, size = 0x12000, scoped, tag = 'internal scratch']
  %s0 = inlined_call_operand.vmem [shape: f32[16,11], index: 0, kind: input, shape index: {}]
  %s1 = inlined_call_operand.vmem [shape: f32[11,512], index: 1, kind: input, shape index: {}]
  %s2 = inlined_call_operand.vmem [shape: f32[1,512], index: 2, kind: input, shape index: {}]
  %s3 = inlined_call_operand.vmem [shape: f32[16,512], index: 3, kind: output, shape index: {}]
  %s4 = sld [smem:[#allocation0]]
  $region22: #{lstm_forward.3} parent=0
    _
  %s6 = ssub.s32 1, %s4
  %s7 = scalar_select 0, %s6, %s4
  // Predicated region
  $region2: #{lstm_forward.3} parent=0 // pred_check
    _
  $region3: #{lstm_forward.3} parent=0 // pred_check_branch
    %9 = sbr.rel (0) target = $region5
  $region4: #{lstm_forward.3} parent=0 // pred_region
    _
  $region5: #{lstm_forward.3} parent=0 // pred_fallthru
    _
  // Predicated region
  $region6: #{lstm_forward.3} parent=0 // pred_check
    _
  $region7: #{lstm_forward.3} parent=0 // pred_check_branch
    %11 = sbr.rel (0) target = $region9
  $region8: #{lstm_forward.3} parent=0 // pred_region
    _
  $region9: #{lstm_forward.3} parent=0 // pred_fallthru
    _
  // Predicated region
  $region10: #{lstm_forward.3} parent=0 // pred_check
    _
  $region11: #{lstm_forward.3} parent=0 // pred_check_branch
    %13 = sbr.rel (0) target = $region13
  $region12: #{lstm_forward.3} parent=0 // pred_region
    _
  $region13: #{lstm_forward.3} parent=0 // pred_fallthru
    _
  %v14 = vld [vmem:[%s0] sm:$0xff]
  %v15 = vld [vmem:[%s0 + $0x8] sm:$0xff]
  %v16 = vld [vmem:[%s1] sm:$0xff]
  %v17 = vld [vmem:[%s1 + $0x8] sm:$0xff]
  %v18 = vld [vmem:[%s1 + $0x10] sm:$0xff]
  %v19 = vld [vmem:[%s1 + $0x18] sm:$0xff]
  %v20 = vld [vmem:[%s1 + $0x20] sm:$0x7]
  %v21 = vld [vmem:[%s1 + $0x28] sm:$0x7]
  %v22 = vld [vmem:[%s1 + $0x30] sm:$0x7]
  %v23 = vld [vmem:[%s1 + $0x38] sm:$0x7]
  %v24 = vld [vmem:[%s2] sm:$0xf]
  %v26 = vlaneseq
  %v27 = vshrl.u32 %v26, 7
  %v28 = vsub.s32 0, %v27
  %v29 = vrot.slane %v24, %v28
  %v30 = vlaneseq
  %v31 = vshrl.u32 %v30, 7
  %v32 = vsub.s32 1, %v31
  %v33 = vrot.slane %v24, %v32
  %v34 = vlaneseq
  %v35 = vshrl.u32 %v34, 7
  %v36 = vsub.s32 2, %v35
  %v37 = vrot.slane %v24, %v36
  %v38 = vlaneseq
  %v39 = vshrl.u32 %v38, 7
  %v40 = vsub.s32 3, %v39
  %v41 = vrot.slane %v24, %v40
  %vm46 = vcmask 89088
  %v48 = vsel %vm46, %v14, 0
  %v51 = vsel %vm46, %v15, 0
  %vm53 = vcmask 1042432
  %v55 = vsel %vm53, %v20, 0
  %v58 = vsel %vm53, %v21, 0
  %v61 = vsel %vm53, %v22, 0
  %v64 = vsel %vm53, %v23, 0
  %66 = vmatprep.subr.mxu0 %v17
  %67 = vmatpush1.msra.mxu0 %v16
  %68 = vmatprep.subr.mxu0 %v58
  %69 = vmatpush1.msra.mxu0 %v55
  %70 = vmatprep.subr.mxu0 0.0
  %71 = vmatpush1.msra.mxu0 0.0
  %72 = vmatprep.subr.mxu0 0.0
  %73 = vmatpush1.msra.mxu0 0.0
  %74 = vmatprep.subr.mxu0 0.0
  %75 = vmatpush1.msra.mxu0 0.0
  %76 = vmatprep.subr.mxu0 0.0
  %77 = vmatpush1.msra.mxu0 0.0
  %78 = vmatprep.subr.mxu0 0.0
  %79 = vmatpush1.msra.mxu0 0.0
  %80 = vmatprep.subr.mxu0 0.0
  %81 = vmatpush1.msra.mxu0 0.0
  %82 = vmatprep.subr.mxu0 0.0
  %83 = vmatpush1.msra.mxu0 0.0
  %84 = vmatprep.subr.mxu0 0.0
  %85 = vmatpush1.msra.mxu0 0.0
  %86 = vmatprep.subr.mxu0 0.0
  %87 = vmatpush1.msra.mxu0 0.0
  %88 = vmatprep.subr.mxu0 0.0
  %89 = vmatpush1.msra.mxu0 0.0
  %90 = vmatprep.subr.mxu0 0.0
  %91 = vmatpush1.msra.mxu0 0.0
  %92 = vmatprep.subr.mxu0 0.0
  %93 = vmatpush1.msra.mxu0 0.0
  %94 = vmatprep.subr.mxu0 0.0
  %95 = vmatpush1.msra.mxu0 0.0
  %96 = vmatprep.subr.mxu0 0.0
  %97 = vmatpush1.msra.mxu0 0.0
  %98 = vmatprep.subr.mxu0 0.0
  %99 = vmatpush1.msra.mxu0 0.0
  %100 = vmatprep.subr.mxu0 0.0
  %101 = vmatpush1.msra.mxu0 0.0
  %102 = vmatprep.subr.mxu0 0.0
  %103 = vmatpush1.msra.mxu0 0.0
  %104 = vmatprep.subr.mxu0 0.0
  %105 = vmatpush1.msra.mxu0 0.0
  %106 = vmatprep.subr.mxu0 0.0
  %107 = vmatpush1.msra.mxu0 0.0
  %108 = vmatprep.subr.mxu0 0.0
  %109 = vmatpush1.msra.mxu0 0.0
  %110 = vmatprep.subr.mxu0 0.0
  %111 = vmatpush1.msra.mxu0 0.0
  %112 = vmatprep.subr.mxu0 0.0
  %113 = vmatpush1.msra.mxu0 0.0
  %114 = vmatprep.subr.mxu0 0.0
  %115 = vmatpush1.msra.mxu0 0.0
  %116 = vmatprep.subr.mxu0 0.0
  %117 = vmatpush1.msra.mxu0 0.0
  %118 = vmatprep.subr.mxu0 0.0
  %119 = vmatpush1.msra.mxu0 0.0
  %120 = vmatprep.subr.mxu0 0.0
  %121 = vmatpush1.msra.mxu0 0.0
  %122 = vmatprep.subr.mxu0 0.0
  %123 = vmatpush1.msra.mxu0 0.0
  %124 = vmatprep.subr.mxu0 0.0
  %125 = vmatpush1.msra.mxu0 0.0
  %126 = vmatprep.subr.mxu0 0.0
  %127 = vmatpush1.msra.mxu0 0.0
  %128 = vmatprep.subr.mxu0 0.0
  %129 = vmatpush1.msra.mxu0 0.0
  %130 = vmatprep.mubr.f32.mxu0 0.0
  %131 = vmatmul.mubr.f32.gmra.mrb[0].mxu0 %v48
  %v132 = vpop.f32.mrb[0].mxu0
  %v133 = vadd.f32 %v29, %v132
  %v134 = vpop.f32.mrb[0].mxu0
  %v135 = vadd.f32 %v33, %v134
  %136 = vmatprep.mubr.f32.mxu0 0.0
  %137 = vmatmul.mubr.f32.gmra.mrb[0].mxu0 %v51
  %v138 = vpop.f32.mrb[0].mxu0
  %v139 = vadd.f32 %v29, %v138
  %v140 = vpop.f32.mrb[0].mxu0
  %v141 = vadd.f32 %v33, %v140
  %142 = vdwg.mxu0
  %143 = vmatprep.subr.mxu0 %v19
  %144 = vmatpush1.msra.mxu0 %v18
  %145 = vmatprep.subr.mxu0 %v64
  %146 = vmatpush1.msra.mxu0 %v61
  %147 = vmatprep.subr.mxu0 0.0
  %148 = vmatpush1.msra.mxu0 0.0
  %149 = vmatprep.subr.mxu0 0.0
  %150 = vmatpush1.msra.mxu0 0.0
  %151 = vmatprep.subr.mxu0 0.0
  %152 = vmatpush1.msra.mxu0 0.0
  %153 = vmatprep.subr.mxu0 0.0
  %154 = vmatpush1.msra.mxu0 0.0
  %155 = vmatprep.subr.mxu0 0.0
  %156 = vmatpush1.msra.mxu0 0.0
  %157 = vmatprep.subr.mxu0 0.0
  %158 = vmatpush1.msra.mxu0 0.0
  %159 = vmatprep.subr.mxu0 0.0
  %160 = vmatpush1.msra.mxu0 0.0
  %161 = vmatprep.subr.mxu0 0.0
  %162 = vmatpush1.msra.mxu0 0.0
  %163 = vmatprep.subr.mxu0 0.0
  %164 = vmatpush1.msra.mxu0 0.0
  %165 = vmatprep.subr.mxu0 0.0
  %166 = vmatpush1.msra.mxu0 0.0
  %167 = vmatprep.subr.mxu0 0.0
  %168 = vmatpush1.msra.mxu0 0.0
  %169 = vmatprep.subr.mxu0 0.0
  %170 = vmatpush1.msra.mxu0 0.0
  %171 = vmatprep.subr.mxu0 0.0
  %172 = vmatpush1.msra.mxu0 0.0
  %173 = vmatprep.subr.mxu0 0.0
  %174 = vmatpush1.msra.mxu0 0.0
  %175 = vmatprep.subr.mxu0 0.0
  %176 = vmatpush1.msra.mxu0 0.0
  %177 = vmatprep.subr.mxu0 0.0
  %178 = vmatpush1.msra.mxu0 0.0
  %179 = vmatprep.subr.mxu0 0.0
  %180 = vmatpush1.msra.mxu0 0.0
  %181 = vmatprep.subr.mxu0 0.0
  %182 = vmatpush1.msra.mxu0 0.0
  %183 = vmatprep.subr.mxu0 0.0
  %184 = vmatpush1.msra.mxu0 0.0
  %185 = vmatprep.subr.mxu0 0.0
  %186 = vmatpush1.msra.mxu0 0.0
  %187 = vmatprep.subr.mxu0 0.0
  %188 = vmatpush1.msra.mxu0 0.0
  %189 = vmatprep.subr.mxu0 0.0
  %190 = vmatpush1.msra.mxu0 0.0
  %191 = vmatprep.subr.mxu0 0.0
  %192 = vmatpush1.msra.mxu0 0.0
  %193 = vmatprep.subr.mxu0 0.0
  %194 = vmatpush1.msra.mxu0 0.0
  %195 = vmatprep.subr.mxu0 0.0
  %196 = vmatpush1.msra.mxu0 0.0
  %197 = vmatprep.subr.mxu0 0.0
  %198 = vmatpush1.msra.mxu0 0.0
  %199 = vmatprep.subr.mxu0 0.0
  %200 = vmatpush1.msra.mxu0 0.0
  %201 = vmatprep.subr.mxu0 0.0
  %202 = vmatpush1.msra.mxu0 0.0
  %203 = vmatprep.subr.mxu0 0.0
  %204 = vmatpush1.msra.mxu0 0.0
  %205 = vmatprep.subr.mxu0 0.0
  %206 = vmatpush1.msra.mxu0 0.0
  %207 = vmatprep.mubr.f32.mxu0 0.0
  %208 = vmatmul.mubr.f32.gmra.mrb[0].mxu0 %v48
  %v209 = vpop.f32.mrb[0].mxu0
  %v210 = vadd.f32 %v37, %v209
  %v211 = vpop.f32.mrb[0].mxu0
  %v212 = vadd.f32 %v41, %v211
  %213 = vmatprep.mubr.f32.mxu0 0.0
  %214 = vmatmul.mubr.f32.gmra.mrb[0].mxu0 %v51
  %v215 = vpop.f32.mrb[0].mxu0
  %v216 = vadd.f32 %v37, %v215
  %v217 = vpop.f32.mrb[0].mxu0
  %v218 = vadd.f32 %v41, %v217
  %219 = vdwg.mxu0
  %220 = vst [vmem:[%s3] sm:$0xff] %v133
  %221 = vst [vmem:[%s3 + $0x8] sm:$0xff] %v135
  %222 = vst [vmem:[%s3 + $0x10] sm:$0xff] %v210
  %223 = vst [vmem:[%s3 + $0x18] sm:$0xff] %v212
  %224 = vst [vmem:[%s3 + $0x20] sm:$0xff] %v139
  %225 = vst [vmem:[%s3 + $0x28] sm:$0xff] %v141
  %226 = vst [vmem:[%s3 + $0x30] sm:$0xff] %v216
  %227 = vst [vmem:[%s3 + $0x38] sm:$0xff] %v218
  // Predicated region
  $region14: #{lstm_forward.3} parent=0 // pred_check
    _
  $region15: #{lstm_forward.3} parent=0 // pred_check_branch
    %229 = sbr.rel (0) target = $region17
  $region16: #{lstm_forward.3} parent=0 // pred_region
    _
  $region17: #{lstm_forward.3} parent=0 // pred_fallthru
    _
  // Predicated region
  $region18: #{lstm_forward.3} parent=0 // pred_check
    _
  $region19: #{lstm_forward.3} parent=0 // pred_check_branch
    %231 = sbr.rel (0) target = $region21
  $region20: #{lstm_forward.3} parent=0 // pred_region
    _
  $region21: #{lstm_forward.3} parent=0 // pred_fallthru
    _

// kernel: lstm_forward.4
$region0: #{lstm_forward.4}
  #allocation0 [shape = 'u32[]', space=smem, size = 0x4, offset = 0x4, fixed_abs, tag = 'smem constant byte address 0x4 - core index']
  #allocation1 [shape = 'u32[144,128]{1,0:T(1,128)}', space=vmem, size = 0x12000, scoped, tag = 'internal scratch']
  %s0 = inlined_call_operand.vmem [shape: f32[8,2,512], index: 0, kind: input, shape index: {}]
  %s1 = inlined_call_operand.vmem [shape: f32[2,128], index: 1, kind: input, shape index: {}]
  %s2 = inlined_call_operand.vmem [shape: f32[2,128], index: 2, kind: input, shape index: {}]
  %s3 = inlined_call_operand.vmem [shape: f32[128,512], index: 3, kind: input, shape index: {}]
  %s4 = inlined_call_operand.vmem [shape: f32[8,2,128], index: 4, kind: output, shape index: {0}]
  %s5 = inlined_call_operand.vmem [shape: f32[2,128], index: 5, kind: output, shape index: {1}]
  %s6 = inlined_call_operand.vmem [shape: f32[2,128], index: 6, kind: output, shape index: {2}]
  %7 = xla_tuple %s4, %s5, %s6
  %s8 = sld [smem:[#allocation0]]
  $region42: #{lstm_forward.4} parent=0
    _
  %s10 = ssub.s32 1, %s8
  %s11 = scalar_select 0, %s10, %s8
  // Predicated region
  $region2: #{lstm_forward.4} parent=0 // pred_check
    _
  $region3: #{lstm_forward.4} parent=0 // pred_check_branch
    %13 = sbr.rel (0) target = $region5
  $region4: #{lstm_forward.4} parent=0 // pred_region
    _
  $region5: #{lstm_forward.4} parent=0 // pred_fallthru
    _
  // Predicated region
  $region6: #{lstm_forward.4} parent=0 // pred_check
    _
  $region7: #{lstm_forward.4} parent=0 // pred_check_branch
    %15 = sbr.rel (0) target = $region9
  $region8: #{lstm_forward.4} parent=0 // pred_region
    _
  $region9: #{lstm_forward.4} parent=0 // pred_fallthru
    _
  // Predicated region
  $region10: #{lstm_forward.4} parent=0 // pred_check
    _
  $region11: #{lstm_forward.4} parent=0 // pred_check_branch
    %17 = sbr.rel (0) target = $region13
  $region12: #{lstm_forward.4} parent=0 // pred_region
    _
  $region13: #{lstm_forward.4} parent=0 // pred_fallthru
    _
  // Predicated region
  $region14: #{lstm_forward.4} parent=0 // pred_check
    _
  $region15: #{lstm_forward.4} parent=0 // pred_check_branch
    %19 = sbr.rel (0) target = $region17
  $region16: #{lstm_forward.4} parent=0 // pred_region
    _
  $region17: #{lstm_forward.4} parent=0 // pred_fallthru
    _
  %v20 = vld [vmem:[%s3] sm:$0xff]
  %v21 = vld [vmem:[%s3 + $0x8] sm:$0xff]
  %v22 = vld [vmem:[%s3 + $0x10] sm:$0xff]
  %v23 = vld [vmem:[%s3 + $0x18] sm:$0xff]
  %v24 = vld [vmem:[%s3 + $0x20] sm:$0xff]
  %v25 = vld [vmem:[%s3 + $0x28] sm:$0xff]
  %v26 = vld [vmem:[%s3 + $0x30] sm:$0xff]
  %v27 = vld [vmem:[%s3 + $0x38] sm:$0xff]
  %v28 = vld [vmem:[%s3 + $0x40] sm:$0xff]
  %v29 = vld [vmem:[%s3 + $0x48] sm:$0xff]
  %v30 = vld [vmem:[%s3 + $0x50] sm:$0xff]
  %v31 = vld [vmem:[%s3 + $0x58] sm:$0xff]
  %v32 = vld [vmem:[%s3 + $0x60] sm:$0xff]
  %v33 = vld [vmem:[%s3 + $0x68] sm:$0xff]
  %v34 = vld [vmem:[%s3 + $0x70] sm:$0xff]
  %v35 = vld [vmem:[%s3 + $0x78] sm:$0xff]
  %v36 = vld [vmem:[%s3 + $0x80] sm:$0xff]
  %v37 = vld [vmem:[%s3 + $0x88] sm:$0xff]
  %v38 = vld [vmem:[%s3 + $0x90] sm:$0xff]
  %v39 = vld [vmem:[%s3 + $0x98] sm:$0xff]
  %v40 = vld [vmem:[%s3 + $0xa0] sm:$0xff]
  %v41 = vld [vmem:[%s3 + $0xa8] sm:$0xff]
  %v42 = vld [vmem:[%s3 + $0xb0] sm:$0xff]
  %v43 = vld [vmem:[%s3 + $0xb8] sm:$0xff]
  %v44 = vld [vmem:[%s3 + $0xc0] sm:$0xff]
  %v45 = vld [vmem:[%s3 + $0xc8] sm:$0xff]
  %v46 = vld [vmem:[%s3 + $0xd0] sm:$0xff]
  %v47 = vld [vmem:[%s3 + $0xd8] sm:$0xff]
  %v48 = vld [vmem:[%s3 + $0xe0] sm:$0xff]
  %v49 = vld [vmem:[%s3 + $0xe8] sm:$0xff]
  %v50 = vld [vmem:[%s3 + $0xf0] sm:$0xff]
  %v51 = vld [vmem:[%s3 + $0xf8] sm:$0xff]
  %v52 = vld [vmem:[%s3 + $0x100] sm:$0xff]
  %v53 = vld [vmem:[%s3 + $0x108] sm:$0xff]
  %v54 = vld [vmem:[%s3 + $0x110] sm:$0xff]
  %v55 = vld [vmem:[%s3 + $0x118] sm:$0xff]
  %v56 = vld [vmem:[%s3 + $0x120] sm:$0xff]
  %v57 = vld [vmem:[%s3 + $0x128] sm:$0xff]
  %v58 = vld [vmem:[%s3 + $0x130] sm:$0xff]
  %v59 = vld [vmem:[%s3 + $0x138] sm:$0xff]
  %v60 = vld [vmem:[%s3 + $0x140] sm:$0xff]
  %v61 = vld [vmem:[%s3 + $0x148] sm:$0xff]
  %v62 = vld [vmem:[%s3 + $0x150] sm:$0xff]
  %v63 = vld [vmem:[%s3 + $0x158] sm:$0xff]
  %v64 = vld [vmem:[%s3 + $0x160] sm:$0xff]
  %v65 = vld [vmem:[%s3 + $0x168] sm:$0xff]
  %v66 = vld [vmem:[%s3 + $0x170] sm:$0xff]
  %v67 = vld [vmem:[%s3 + $0x178] sm:$0xff]
  %v68 = vld [vmem:[%s3 + $0x180] sm:$0xff]
  %v69 = vld [vmem:[%s3 + $0x188] sm:$0xff]
  %v70 = vld [vmem:[%s3 + $0x190] sm:$0xff]
  %v71 = vld [vmem:[%s3 + $0x198] sm:$0xff]
  %v72 = vld [vmem:[%s3 + $0x1a0] sm:$0xff]
  %v73 = vld [vmem:[%s3 + $0x1a8] sm:$0xff]
  %v74 = vld [vmem:[%s3 + $0x1b0] sm:$0xff]
  %v75 = vld [vmem:[%s3 + $0x1b8] sm:$0xff]
  %v76 = vld [vmem:[%s3 + $0x1c0] sm:$0xff]
  %v77 = vld [vmem:[%s3 + $0x1c8] sm:$0xff]
  %v78 = vld [vmem:[%s3 + $0x1d0] sm:$0xff]
  %v79 = vld [vmem:[%s3 + $0x1d8] sm:$0xff]
  %v80 = vld [vmem:[%s3 + $0x1e0] sm:$0xff]
  %v81 = vld [vmem:[%s3 + $0x1e8] sm:$0xff]
  %v82 = vld [vmem:[%s3 + $0x1f0] sm:$0xff]
  %v83 = vld [vmem:[%s3 + $0x1f8] sm:$0xff]
  %v84 = vld [vmem:[%s1] sm:$0x3]
  %v85 = vld [vmem:[%s2] sm:$0x3]
  %v86 = vld [vmem:[%s0] sm:$0xff]
  %87 = vmatprep.subr.mxu0 %v21
  %88 = vmatpush1.msra.mxu0 %v20
  %89 = vmatprep.subr.mxu0 %v25
  %90 = vmatpush1.msra.mxu0 %v24
  %91 = vmatprep.subr.mxu0 %v29
  %92 = vmatpush1.msra.mxu0 %v28
  %93 = vmatprep.subr.mxu0 %v33
  %94 = vmatpush1.msra.mxu0 %v32
  %95 = vmatprep.subr.mxu0 %v37
  %96 = vmatpush1.msra.mxu0 %v36
  %97 = vmatprep.subr.mxu0 %v41
  %98 = vmatpush1.msra.mxu0 %v40
  %99 = vmatprep.subr.mxu0 %v45
  %100 = vmatpush1.msra.mxu0 %v44
  %101 = vmatprep.subr.mxu0 %v49
  %102 = vmatpush1.msra.mxu0 %v48
  %103 = vmatprep.subr.mxu0 %v53
  %104 = vmatpush1.msra.mxu0 %v52
  %105 = vmatprep.subr.mxu0 %v57
  %106 = vmatpush1.msra.mxu0 %v56
  %107 = vmatprep.subr.mxu0 %v61
  %108 = vmatpush1.msra.mxu0 %v60
  %109 = vmatprep.subr.mxu0 %v65
  %110 = vmatpush1.msra.mxu0 %v64
  %111 = vmatprep.subr.mxu0 %v69
  %112 = vmatpush1.msra.mxu0 %v68
  %113 = vmatprep.subr.mxu0 %v73
  %114 = vmatpush1.msra.mxu0 %v72
  %115 = vmatprep.subr.mxu0 %v77
  %116 = vmatpush1.msra.mxu0 %v76
  %117 = vmatprep.subr.mxu0 %v81
  %118 = vmatpush1.msra.mxu0 %v80
  %119 = vmatprep.subr.mxu0 0.0
  %120 = vmatpush1.msra.mxu0 0.0
  %121 = vmatprep.subr.mxu0 0.0
  %122 = vmatpush1.msra.mxu0 0.0
  %123 = vmatprep.subr.mxu0 0.0
  %124 = vmatpush1.msra.mxu0 0.0
  %125 = vmatprep.subr.mxu0 0.0
  %126 = vmatpush1.msra.mxu0 0.0
  %127 = vmatprep.subr.mxu0 0.0
  %128 = vmatpush1.msra.mxu0 0.0
  %129 = vmatprep.subr.mxu0 0.0
  %130 = vmatpush1.msra.mxu0 0.0
  %131 = vmatprep.subr.mxu0 0.0
  %132 = vmatpush1.msra.mxu0 0.0
  %133 = vmatprep.subr.mxu0 0.0
  %134 = vmatpush1.msra.mxu0 0.0
  %135 = vmatprep.subr.mxu0 0.0
  %136 = vmatpush1.msra.mxu0 0.0
  %137 = vmatprep.subr.mxu0 0.0
  %138 = vmatpush1.msra.mxu0 0.0
  %139 = vmatprep.subr.mxu0 0.0
  %140 = vmatpush1.msra.mxu0 0.0
  %141 = vmatprep.subr.mxu0 0.0
  %142 = vmatpush1.msra.mxu0 0.0
  %143 = vmatprep.subr.mxu0 0.0
  %144 = vmatpush1.msra.mxu0 0.0
  %145 = vmatprep.subr.mxu0 0.0
  %146 = vmatpush1.msra.mxu0 0.0
  %147 = vmatprep.subr.mxu0 0.0
  %148 = vmatpush1.msra.mxu0 0.0
  %149 = vmatprep.subr.mxu0 0.0
  %150 = vmatpush1.msra.mxu0 0.0
  %151 = vmatprep.mubr.f32.mxu0 0.0
  %152 = vmatmul.mubr.f32.gmra.mrb[0].mxu0 %v84
  %v153 = vpop.f32.mrb[0].mxu0
  %v154 = vadd.f32 0.0, %v153
  %v155 = vpop.f32.mrb[0].mxu0
  %v156 = vadd.f32 0.0, %v155
  %157 = vdwg.mxu0
  %158 = vmatprep.subr.mxu0 %v23
  %159 = vmatpush1.msra.mxu0 %v22
  %160 = vmatprep.subr.mxu0 %v27
  %161 = vmatpush1.msra.mxu0 %v26
  %162 = vmatprep.subr.mxu0 %v31
  %163 = vmatpush1.msra.mxu0 %v30
  %164 = vmatprep.subr.mxu0 %v35
  %165 = vmatpush1.msra.mxu0 %v34
  %166 = vmatprep.subr.mxu0 %v39
  %167 = vmatpush1.msra.mxu0 %v38
  %168 = vmatprep.subr.mxu0 %v43
  %169 = vmatpush1.msra.mxu0 %v42
  %170 = vmatprep.subr.mxu0 %v47
  %171 = vmatpush1.msra.mxu0 %v46
  %172 = vmatprep.subr.mxu0 %v51
  %173 = vmatpush1.msra.mxu0 %v50
  %174 = vmatprep.subr.mxu0 %v55
  %175 = vmatpush1.msra.mxu0 %v54
  %176 = vmatprep.subr.mxu0 %v59
  %177 = vmatpush1.msra.mxu0 %v58
  %178 = vmatprep.subr.mxu0 %v63
  %179 = vmatpush1.msra.mxu0 %v62
  %180 = vmatprep.subr.mxu0 %v67
  %181 = vmatpush1.msra.mxu0 %v66
  %182 = vmatprep.subr.mxu0 %v71
  %183 = vmatpush1.msra.mxu0 %v70
  %184 = vmatprep.subr.mxu0 %v75
  %185 = vmatpush1.msra.mxu0 %v74
  %186 = vmatprep.subr.mxu0 %v79
  %187 = vmatpush1.msra.mxu0 %v78
  %188 = vmatprep.subr.mxu0 %v83
  %189 = vmatpush1.msra.mxu0 %v82
  %190 = vmatprep.subr.mxu0 0.0
  %191 = vmatpush1.msra.mxu0 0.0
  %192 = vmatprep.subr.mxu0 0.0
  %193 = vmatpush1.msra.mxu0 0.0
  %194 = vmatprep.subr.mxu0 0.0
  %195 = vmatpush1.msra.mxu0 0.0
  %196 = vmatprep.subr.mxu0 0.0
  %197 = vmatpush1.msra.mxu0 0.0
  %198 = vmatprep.subr.mxu0 0.0
  %199 = vmatpush1.msra.mxu0 0.0
  %200 = vmatprep.subr.mxu0 0.0
  %201 = vmatpush1.msra.mxu0 0.0
  %202 = vmatprep.subr.mxu0 0.0
  %203 = vmatpush1.msra.mxu0 0.0
  %204 = vmatprep.subr.mxu0 0.0
  %205 = vmatpush1.msra.mxu0 0.0
  %206 = vmatprep.subr.mxu0 0.0
  %207 = vmatpush1.msra.mxu0 0.0
  %208 = vmatprep.subr.mxu0 0.0
  %209 = vmatpush1.msra.mxu0 0.0
  %210 = vmatprep.subr.mxu0 0.0
  %211 = vmatpush1.msra.mxu0 0.0
  %212 = vmatprep.subr.mxu0 0.0
  %213 = vmatpush1.msra.mxu0 0.0
  %214 = vmatprep.subr.mxu0 0.0
  %215 = vmatpush1.msra.mxu0 0.0
  %216 = vmatprep.subr.mxu0 0.0
  %217 = vmatpush1.msra.mxu0 0.0
  %218 = vmatprep.subr.mxu0 0.0
  %219 = vmatpush1.msra.mxu0 0.0
  %220 = vmatprep.subr.mxu0 0.0
  %221 = vmatpush1.msra.mxu0 0.0
  %222 = vmatprep.mubr.f32.mxu0 0.0
  %223 = vmatmul.mubr.f32.gmra.mrb[0].mxu0 %v84
  %v224 = vpop.f32.mrb[0].mxu0
  %v225 = vadd.f32 0.0, %v224
  %v226 = vpop.f32.mrb[0].mxu0
  %v227 = vadd.f32 0.0, %v226
  %228 = vdwg.mxu0
  %v233 = vcombine.low %v154, %v156
  %v234 = vcombine.low %v225, %v227
  %v236 = vunpack.c.l.s4 1983009808
  %v237 = vunpack.c.0.s8 %v236
  %v238 = vlaneseq
  %v239 = vshrl.u32 %v238, 7
  %v240 = vsub.s32 %v237, %v239
  %v241 = vrot.slane %v233, %v240
  %v243 = vunpack.c.l.s4 1983009808
  %v244 = vunpack.c.0.s8 %v243
  %v245 = vlaneseq
  %v246 = vshrl.u32 %v245, 7
  %v247 = vsub.s32 %v244, %v246
  %v248 = vrot.slane %v234, %v247
  %v249 = vcombine.low %v241, %v248
  %v251 = vadd.f32 %v86, %v249
  %v252 = vxor.u32 %v251, 2147483648
  %v253 = vmul.f32 %v252, 1.442695
  %v254 = vpow.pop %v253
  %v255 = vadd.f32 %v254, 1.0
  %v256 = vrcp.pop %v255
  %v257 = vmul.f32 1.0, %v256
  %v259 = vrot.slane %v251, 2
  %v261 = vxor.u32 %v259, 2147483648
  %v262 = vmul.f32 %v261, 1.442695
  %v263 = vpow.pop %v262
  %v264 = vadd.f32 %v263, 1.0
  %v265 = vrcp.pop %v264
  %v266 = vmul.f32 1.0, %v265
  %v267 = vrot.slane %v251, 4
  %v269 = vtanh.pop %v267
  %v270 = vrot.slane %v251, 6
  %v272 = vxor.u32 %v270, 2147483648
  %v273 = vmul.f32 %v272, 1.442695
  %v274 = vpow.pop %v273
  %v275 = vadd.f32 %v274, 1.0
  %v276 = vrcp.pop %v275
  %v277 = vmul.f32 1.0, %v276
  %v278 = vmul.f32 %v266, %v85
  %v279 = vmul.f32 %v257, %v269
  %v280 = vadd.f32 %v278, %v279
  %v281 = vtanh.pop %v280
  %v282 = vmul.f32 %v277, %v281
  %283 = vst [vmem:[%s4] sm:$0x3] %v282
  %s284 = scalar_lea.vmem %s0, 8
  %v285 = vld [vmem:[%s284] sm:$0xff]
  %286 = vmatprep.subr.mxu0 %v21
  %287 = vmatpush1.msra.mxu0 %v20
  %288 = vmatprep.subr.mxu0 %v25
  %289 = vmatpush1.msra.mxu0 %v24
  %290 = vmatprep.subr.mxu0 %v29
  %291 = vmatpush1.msra.mxu0 %v28
  %292 = vmatprep.subr.mxu0 %v33
  %293 = vmatpush1.msra.mxu0 %v32
  %294 = vmatprep.subr.mxu0 %v37
  %295 = vmatpush1.msra.mxu0 %v36
  %296 = vmatprep.subr.mxu0 %v41
  %297 = vmatpush1.msra.mxu0 %v40
  %298 = vmatprep.subr.mxu0 %v45
  %299 = vmatpush1.msra.mxu0 %v44
  %300 = vmatprep.subr.mxu0 %v49
  %301 = vmatpush1.msra.mxu0 %v48
  %302 = vmatprep.subr.mxu0 %v53
  %303 = vmatpush1.msra.mxu0 %v52
  %304 = vmatprep.subr.mxu0 %v57
  %305 = vmatpush1.msra.mxu0 %v56
  %306 = vmatprep.subr.mxu0 %v61
  %307 = vmatpush1.msra.mxu0 %v60
  %308 = vmatprep.subr.mxu0 %v65
  %309 = vmatpush1.msra.mxu0 %v64
  %310 = vmatprep.subr.mxu0 %v69
  %311 = vmatpush1.msra.mxu0 %v68
  %312 = vmatprep.subr.mxu0 %v73
  %313 = vmatpush1.msra.mxu0 %v72
  %314 = vmatprep.subr.mxu0 %v77
  %315 = vmatpush1.msra.mxu0 %v76
  %316 = vmatprep.subr.mxu0 %v81
  %317 = vmatpush1.msra.mxu0 %v80
  %318 = vmatprep.subr.mxu0 0.0
  %319 = vmatpush1.msra.mxu0 0.0
  %320 = vmatprep.subr.mxu0 0.0
  %321 = vmatpush1.msra.mxu0 0.0
  %322 = vmatprep.subr.mxu0 0.0
  %323 = vmatpush1.msra.mxu0 0.0
  %324 = vmatprep.subr.mxu0 0.0
  %325 = vmatpush1.msra.mxu0 0.0
  %326 = vmatprep.subr.mxu0 0.0
  %327 = vmatpush1.msra.mxu0 0.0
  %328 = vmatprep.subr.mxu0 0.0
  %329 = vmatpush1.msra.mxu0 0.0
  %330 = vmatprep.subr.mxu0 0.0
  %331 = vmatpush1.msra.mxu0 0.0
  %332 = vmatprep.subr.mxu0 0.0
  %333 = vmatpush1.msra.mxu0 0.0
  %334 = vmatprep.subr.mxu0 0.0
  %335 = vmatpush1.msra.mxu0 0.0
  %336 = vmatprep.subr.mxu0 0.0
  %337 = vmatpush1.msra.mxu0 0.0
  %338 = vmatprep.subr.mxu0 0.0
  %339 = vmatpush1.msra.mxu0 0.0
  %340 = vmatprep.subr.mxu0 0.0
  %341 = vmatpush1.msra.mxu0 0.0
  %342 = vmatprep.subr.mxu0 0.0
  %343 = vmatpush1.msra.mxu0 0.0
  %344 = vmatprep.subr.mxu0 0.0
  %345 = vmatpush1.msra.mxu0 0.0
  %346 = vmatprep.subr.mxu0 0.0
  %347 = vmatpush1.msra.mxu0 0.0
  %348 = vmatprep.subr.mxu0 0.0
  %349 = vmatpush1.msra.mxu0 0.0
  %350 = vmatprep.mubr.f32.mxu0 0.0
  %351 = vmatmul.mubr.f32.gmra.mrb[0].mxu0 %v282
  %v352 = vpop.f32.mrb[0].mxu0
  %v353 = vadd.f32 0.0, %v352
  %v354 = vpop.f32.mrb[0].mxu0
  %v355 = vadd.f32 0.0, %v354
  %356 = vdwg.mxu0
  %357 = vmatprep.subr.mxu0 %v23
  %358 = vmatpush1.msra.mxu0 %v22
  %359 = vmatprep.subr.mxu0 %v27
  %360 = vmatpush1.msra.mxu0 %v26
  %361 = vmatprep.subr.mxu0 %v31
  %362 = vmatpush1.msra.mxu0 %v30
  %363 = vmatprep.subr.mxu0 %v35
  %364 = vmatpush1.msra.mxu0 %v34
  %365 = vmatprep.subr.mxu0 %v39
  %366 = vmatpush1.msra.mxu0 %v38
  %367 = vmatprep.subr.mxu0 %v43
  %368 = vmatpush1.msra.mxu0 %v42
  %369 = vmatprep.subr.mxu0 %v47
  %370 = vmatpush1.msra.mxu0 %v46
  %371 = vmatprep.subr.mxu0 %v51
  %372 = vmatpush1.msra.mxu0 %v50
  %373 = vmatprep.subr.mxu0 %v55
  %374 = vmatpush1.msra.mxu0 %v54
  %375 = vmatprep.subr.mxu0 %v59
  %376 = vmatpush1.msra.mxu0 %v58
  %377 = vmatprep.subr.mxu0 %v63
  %378 = vmatpush1.msra.mxu0 %v62
  %379 = vmatprep.subr.mxu0 %v67
  %380 = vmatpush1.msra.mxu0 %v66
  %381 = vmatprep.subr.mxu0 %v71
  %382 = vmatpush1.msra.mxu0 %v70
  %383 = vmatprep.subr.mxu0 %v75
  %384 = vmatpush1.msra.mxu0 %v74
  %385 = vmatprep.subr.mxu0 %v79
  %386 = vmatpush1.msra.mxu0 %v78
  %387 = vmatprep.subr.mxu0 %v83
  %388 = vmatpush1.msra.mxu0 %v82
  %389 = vmatprep.subr.mxu0 0.0
  %390 = vmatpush1.msra.mxu0 0.0
  %391 = vmatprep.subr.mxu0 0.0
  %392 = vmatpush1.msra.mxu0 0.0
  %393 = vmatprep.subr.mxu0 0.0
  %394 = vmatpush1.msra.mxu0 0.0
  %395 = vmatprep.subr.mxu0 0.0
  %396 = vmatpush1.msra.mxu0 0.0
  %397 = vmatprep.subr.mxu0 0.0
  %398 = vmatpush1.msra.mxu0 0.0
  %399 = vmatprep.subr.mxu0 0.0
  %400 = vmatpush1.msra.mxu0 0.0
  %401 = vmatprep.subr.mxu0 0.0
  %402 = vmatpush1.msra.mxu0 0.0
  %403 = vmatprep.subr.mxu0 0.0
  %404 = vmatpush1.msra.mxu0 0.0
  %405 = vmatprep.subr.mxu0 0.0
  %406 = vmatpush1.msra.mxu0 0.0
  %407 = vmatprep.subr.mxu0 0.0
  %408 = vmatpush1.msra.mxu0 0.0
  %409 = vmatprep.subr.mxu0 0.0
  %410 = vmatpush1.msra.mxu0 0.0
  %411 = vmatprep.subr.mxu0 0.0
  %412 = vmatpush1.msra.mxu0 0.0
  %413 = vmatprep.subr.mxu0 0.0
  %414 = vmatpush1.msra.mxu0 0.0
  %415 = vmatprep.subr.mxu0 0.0
  %416 = vmatpush1.msra.mxu0 0.0
  %417 = vmatprep.subr.mxu0 0.0
  %418 = vmatpush1.msra.mxu0 0.0
  %419 = vmatprep.subr.mxu0 0.0
  %420 = vmatpush1.msra.mxu0 0.0
  %421 = vmatprep.mubr.f32.mxu0 0.0
  %422 = vmatmul.mubr.f32.gmra.mrb[0].mxu0 %v282
  %v423 = vpop.f32.mrb[0].mxu0
  %v424 = vadd.f32 0.0, %v423
  %v425 = vpop.f32.mrb[0].mxu0
  %v426 = vadd.f32 0.0, %v425
  %427 = vdwg.mxu0
  %v432 = vcombine.low %v353, %v355
  %v433 = vcombine.low %v424, %v426
  %v435 = vunpack.c.l.s4 1983009808
  %v436 = vunpack.c.0.s8 %v435
  %v437 = vlaneseq
  %v438 = vshrl.u32 %v437, 7
  %v439 = vsub.s32 %v436, %v438
  %v440 = vrot.slane %v432, %v439
  %v442 = vunpack.c.l.s4 1983009808
  %v443 = vunpack.c.0.s8 %v442
  %v444 = vlaneseq
  %v445 = vshrl.u32 %v444, 7
  %v446 = vsub.s32 %v443, %v445
  %v447 = vrot.slane %v433, %v446
  %v448 = vcombine.low %v440, %v447
  %v450 = vadd.f32 %v285, %v448
  %v451 = vxor.u32 %v450, 2147483648
  %v452 = vmul.f32 %v451, 1.442695
  %v453 = vpow.pop %v452
  %v454 = vadd.f32 %v453, 1.0
  %v455 = vrcp.pop %v454
  %v456 = vmul.f32 1.0, %v455
  %v458 = vrot.slane %v450, 2
  %v460 = vxor.u32 %v458, 2147483648
  %v461 = vmul.f32 %v460, 1.442695
  %v462 = vpow.pop %v461
  %v463 = vadd.f32 %v462, 1.0
  %v464 = vrcp.pop %v463
  %v465 = vmul.f32 1.0, %v464
  %v466 = vrot.slane %v450, 4
  %v468 = vtanh.pop %v466
  %v469 = vrot.slane %v450, 6
  %v471 = vxor.u32 %v469, 2147483648
  %v472 = vmul.f32 %v471, 1.442695
  %v473 = vpow.pop %v472
  %v474 = vadd.f32 %v473, 1.0
  %v475 = vrcp.pop %v474
  %v476 = vmul.f32 1.0, %v475
  %v477 = vmul.f32 %v465, %v280
  %v478 = vmul.f32 %v456, %v468
  %v479 = vadd.f32 %v477, %v478
  %v480 = vtanh.pop %v479
  %v481 = vmul.f32 %v476, %v480
  %s482 = scalar_lea.vmem %s4, 2
  %483 = vst [vmem:[%s482] sm:$0x3] %v481
  %s484 = scalar_lea.vmem %s0, 16
  %v485 = vld [vmem:[%s484] sm:$0xff]
  %486 = vmatprep.subr.mxu0 %v21
  %487 = vmatpush1.msra.mxu0 %v20
  %488 = vmatprep.subr.mxu0 %v25
  %489 = vmatpush1.msra.mxu0 %v24
  %490 = vmatprep.subr.mxu0 %v29
  %491 = vmatpush1.msra.mxu0 %v28
  %492 = vmatprep.subr.mxu0 %v33
  %493 = vmatpush1.msra.mxu0 %v32
  %494 = vmatprep.subr.mxu0 %v37
  %495 = vmatpush1.msra.mxu0 %v36
  %496 = vmatprep.subr.mxu0 %v41
  %497 = vmatpush1.msra.mxu0 %v40
  %498 = vmatprep.subr.mxu0 %v45
  %499 = vmatpush1.msra.mxu0 %v44
  %500 = vmatprep.subr.mxu0 %v49
  %501 = vmatpush1.msra.mxu0 %v48
  %502 = vmatprep.subr.mxu0 %v53
  %503 = vmatpush1.msra.mxu0 %v52
  %504 = vmatprep.subr.mxu0 %v57
  %505 = vmatpush1.msra.mxu0 %v56
  %506 = vmatprep.subr.mxu0 %v61
  %507 = vmatpush1.msra.mxu0 %v60
  %508 = vmatprep.subr.mxu0 %v65
  %509 = vmatpush1.msra.mxu0 %v64
  %510 = vmatprep.subr.mxu0 %v69
  %511 = vmatpush1.msra.mxu0 %v68
  %512 = vmatprep.subr.mxu0 %v73
  %513 = vmatpush1.msra.mxu0 %v72
  %514 = vmatprep.subr.mxu0 %v77
  %515 = vmatpush1.msra.mxu0 %v76
  %516 = vmatprep.subr.mxu0 %v81
  %517 = vmatpush1.msra.mxu0 %v80
  %518 = vmatprep.subr.mxu0 0.0
  %519 = vmatpush1.msra.mxu0 0.0
  %520 = vmatprep.subr.mxu0 0.0
  %521 = vmatpush1.msra.mxu0 0.0
  %522 = vmatprep.subr.mxu0 0.0
  %523 = vmatpush1.msra.mxu0 0.0
  %524 = vmatprep.subr.mxu0 0.0
  %525 = vmatpush1.msra.mxu0 0.0
  %526 = vmatprep.subr.mxu0 0.0
  %527 = vmatpush1.msra.mxu0 0.0
  %528 = vmatprep.subr.mxu0 0.0
  %529 = vmatpush1.msra.mxu0 0.0
  %530 = vmatprep.subr.mxu0 0.0
  %531 = vmatpush1.msra.mxu0 0.0
  %532 = vmatprep.subr.mxu0 0.0
  %533 = vmatpush1.msra.mxu0 0.0
  %534 = vmatprep.subr.mxu0 0.0
  %535 = vmatpush1.msra.mxu0 0.0
  %536 = vmatprep.subr.mxu0 0.0
  %537 = vmatpush1.msra.mxu0 0.0
  %538 = vmatprep.subr.mxu0 0.0
  %539 = vmatpush1.msra.mxu0 0.0
  %540 = vmatprep.subr.mxu0 0.0
  %541 = vmatpush1.msra.mxu0 0.0
  %542 = vmatprep.subr.mxu0 0.0
  %543 = vmatpush1.msra.mxu0 0.0
  %544 = vmatprep.subr.mxu0 0.0
  %545 = vmatpush1.msra.mxu0 0.0
  %546 = vmatprep.subr.mxu0 0.0
  %547 = vmatpush1.msra.mxu0 0.0
  %548 = vmatprep.subr.mxu0 0.0
  %549 = vmatpush1.msra.mxu0 0.0
  %550 = vmatprep.mubr.f32.mxu0 0.0
  %551 = vmatmul.mubr.f32.gmra.mrb[0].mxu0 %v481
  %v552 = vpop.f32.mrb[0].mxu0
  %v553 = vadd.f32 0.0, %v552
  %v554 = vpop.f32.mrb[0].mxu0
  %v555 = vadd.f32 0.0, %v554
  %556 = vdwg.mxu0
  %557 = vmatprep.subr.mxu0 %v23
  %558 = vmatpush1.msra.mxu0 %v22
  %559 = vmatprep.subr.mxu0 %v27
  %560 = vmatpush1.msra.mxu0 %v26
  %561 = vmatprep.subr.mxu0 %v31
  %562 = vmatpush1.msra.mxu0 %v30
  %563 = vmatprep.subr.mxu0 %v35
  %564 = vmatpush1.msra.mxu0 %v34
  %565 = vmatprep.subr.mxu0 %v39
  %566 = vmatpush1.msra.mxu0 %v38
  %567 = vmatprep.subr.mxu0 %v43
  %568 = vmatpush1.msra.mxu0 %v42
  %569 = vmatprep.subr.mxu0 %v47
  %570 = vmatpush1.msra.mxu0 %v46
  %571 = vmatprep.subr.mxu0 %v51
  %572 = vmatpush1.msra.mxu0 %v50
  %573 = vmatprep.subr.mxu0 %v55
  %574 = vmatpush1.msra.mxu0 %v54
  %575 = vmatprep.subr.mxu0 %v59
  %576 = vmatpush1.msra.mxu0 %v58
  %577 = vmatprep.subr.mxu0 %v63
  %578 = vmatpush1.msra.mxu0 %v62
  %579 = vmatprep.subr.mxu0 %v67
  %580 = vmatpush1.msra.mxu0 %v66
  %581 = vmatprep.subr.mxu0 %v71
  %582 = vmatpush1.msra.mxu0 %v70
  %583 = vmatprep.subr.mxu0 %v75
  %584 = vmatpush1.msra.mxu0 %v74
  %585 = vmatprep.subr.mxu0 %v79
  %586 = vmatpush1.msra.mxu0 %v78
  %587 = vmatprep.subr.mxu0 %v83
  %588 = vmatpush1.msra.mxu0 %v82
  %589 = vmatprep.subr.mxu0 0.0
  %590 = vmatpush1.msra.mxu0 0.0
  %591 = vmatprep.subr.mxu0 0.0
  %592 = vmatpush1.msra.mxu0 0.0
  %593 = vmatprep.subr.mxu0 0.0
  %594 = vmatpush1.msra.mxu0 0.0
  %595 = vmatprep.subr.mxu0 0.0
  %596 = vmatpush1.msra.mxu0 0.0
  %597 = vmatprep.subr.mxu0 0.0
  %598 = vmatpush1.msra.mxu0 0.0
  %599 = vmatprep.subr.mxu0 0.0
  %600 = vmatpush1.msra.mxu0 0.0
  %601 = vmatprep.subr.mxu0 0.0
  %602 = vmatpush1.msra.mxu0 0.0
  %603 = vmatprep.subr.mxu0 0.0
  %604 = vmatpush1.msra.mxu0 0.0
  %605 = vmatprep.subr.mxu0 0.0
  %606 = vmatpush1.msra.mxu0 0.0
  %607 = vmatprep.subr.mxu0 0.0
  %608 = vmatpush1.msra.mxu0 0.0
  %609 = vmatprep.subr.mxu0 0.0
  %610 = vmatpush1.msra.mxu0 0.0
  %611 = vmatprep.subr.mxu0 0.0
  %612 = vmatpush1.msra.mxu0 0.0
  %613 = vmatprep.subr.mxu0 0.0
  %614 = vmatpush1.msra.mxu0 0.0
  %615 = vmatprep.subr.mxu0 0.0
  %616 = vmatpush1.msra.mxu0 0.0
  %617 = vmatprep.subr.mxu0 0.0
  %618 = vmatpush1.msra.mxu0 0.0
  %619 = vmatprep.subr.mxu0 0.0
  %620 = vmatpush1.msra.mxu0 0.0
  %621 = vmatprep.mubr.f32.mxu0 0.0
  %622 = vmatmul.mubr.f32.gmra.mrb[0].mxu0 %v481
  %v623 = vpop.f32.mrb[0].mxu0
  %v624 = vadd.f32 0.0, %v623
  %v625 = vpop.f32.mrb[0].mxu0
  %v626 = vadd.f32 0.0, %v625
  %627 = vdwg.mxu0
  %v632 = vcombine.low %v553, %v555
  %v633 = vcombine.low %v624, %v626
  %v635 = vunpack.c.l.s4 1983009808
  %v636 = vunpack.c.0.s8 %v635
  %v637 = vlaneseq
  %v638 = vshrl.u32 %v637, 7
  %v639 = vsub.s32 %v636, %v638
  %v640 = vrot.slane %v632, %v639
  %v642 = vunpack.c.l.s4 1983009808
  %v643 = vunpack.c.0.s8 %v642
  %v644 = vlaneseq
  %v645 = vshrl.u32 %v644, 7
  %v646 = vsub.s32 %v643, %v645
  %v647 = vrot.slane %v633, %v646
  %v648 = vcombine.low %v640, %v647
  %v650 = vadd.f32 %v485, %v648
  %v651 = vxor.u32 %v650, 2147483648
  %v652 = vmul.f32 %v651, 1.442695
  %v653 = vpow.pop %v652
  %v654 = vadd.f32 %v653, 1.0
  %v655 = vrcp.pop %v654
  %v656 = vmul.f32 1.0, %v655
  %v658 = vrot.slane %v650, 2
  %v660 = vxor.u32 %v658, 2147483648
  %v661 = vmul.f32 %v660, 1.442695
  %v662 = vpow.pop %v661
  %v663 = vadd.f32 %v662, 1.0
  %v664 = vrcp.pop %v663
  %v665 = vmul.f32 1.0, %v664
  %v666 = vrot.slane %v650, 4
  %v668 = vtanh.pop %v666
  %v669 = vrot.slane %v650, 6
  %v671 = vxor.u32 %v669, 2147483648
  %v672 = vmul.f32 %v671, 1.442695
  %v673 = vpow.pop %v672
  %v674 = vadd.f32 %v673, 1.0
  %v675 = vrcp.pop %v674
  %v676 = vmul.f32 1.0, %v675
  %v677 = vmul.f32 %v665, %v479
  %v678 = vmul.f32 %v656, %v668
  %v679 = vadd.f32 %v677, %v678
  %v680 = vtanh.pop %v679
  %v681 = vmul.f32 %v676, %v680
  %s682 = scalar_lea.vmem %s4, 4
  %683 = vst [vmem:[%s682] sm:$0x3] %v681
  %s684 = scalar_lea.vmem %s0, 24
  %v685 = vld [vmem:[%s684] sm:$0xff]
  %686 = vmatprep.subr.mxu0 %v21
  %687 = vmatpush1.msra.mxu0 %v20
  %688 = vmatprep.subr.mxu0 %v25
  %689 = vmatpush1.msra.mxu0 %v24
  %690 = vmatprep.subr.mxu0 %v29
  %691 = vmatpush1.msra.mxu0 %v28
  %692 = vmatprep.subr.mxu0 %v33
  %693 = vmatpush1.msra.mxu0 %v32
  %694 = vmatprep.subr.mxu0 %v37
  %695 = vmatpush1.msra.mxu0 %v36
  %696 = vmatprep.subr.mxu0 %v41
  %697 = vmatpush1.msra.mxu0 %v40
  %698 = vmatprep.subr.mxu0 %v45
  %699 = vmatpush1.msra.mxu0 %v44
  %700 = vmatprep.subr.mxu0 %v49
  %701 = vmatpush1.msra.mxu0 %v48
  %702 = vmatprep.subr.mxu0 %v53
  %703 = vmatpush1.msra.mxu0 %v52
  %704 = vmatprep.subr.mxu0 %v57
  %705 = vmatpush1.msra.mxu0 %v56
  %706 = vmatprep.subr.mxu0 %v61
  %707 = vmatpush1.msra.mxu0 %v60
  %708 = vmatprep.subr.mxu0 %v65
  %709 = vmatpush1.msra.mxu0 %v64
  %710 = vmatprep.subr.mxu0 %v69
  %711 = vmatpush1.msra.mxu0 %v68
  %712 = vmatprep.subr.mxu0 %v73
  %713 = vmatpush1.msra.mxu0 %v72
  %714 = vmatprep.subr.mxu0 %v77
  %715 = vmatpush1.msra.mxu0 %v76
  %716 = vmatprep.subr.mxu0 %v81
  %717 = vmatpush1.msra.mxu0 %v80
  %718 = vmatprep.subr.mxu0 0.0
  %719 = vmatpush1.msra.mxu0 0.0
  %720 = vmatprep.subr.mxu0 0.0
  %721 = vmatpush1.msra.mxu0 0.0
  %722 = vmatprep.subr.mxu0 0.0
  %723 = vmatpush1.msra.mxu0 0.0
  %724 = vmatprep.subr.mxu0 0.0
  %725 = vmatpush1.msra.mxu0 0.0
  %726 = vmatprep.subr.mxu0 0.0
  %727 = vmatpush1.msra.mxu0 0.0
  %728 = vmatprep.subr.mxu0 0.0
  %729 = vmatpush1.msra.mxu0 0.0
  %730 = vmatprep.subr.mxu0 0.0
  %731 = vmatpush1.msra.mxu0 0.0
  %732 = vmatprep.subr.mxu0 0.0
  %733 = vmatpush1.msra.mxu0 0.0
  %734 = vmatprep.subr.mxu0 0.0
  %735 = vmatpush1.msra.mxu0 0.0
  %736 = vmatprep.subr.mxu0 0.0
  %737 = vmatpush1.msra.mxu0 0.0
  %738 = vmatprep.subr.mxu0 0.0
  %739 = vmatpush1.msra.mxu0 0.0
  %740 = vmatprep.subr.mxu0 0.0
  %741 = vmatpush1.msra.mxu0 0.0
  %742 = vmatprep.subr.mxu0 0.0
  %743 = vmatpush1.msra.mxu0 0.0
  %744 = vmatprep.subr.mxu0 0.0
  %745 = vmatpush1.msra.mxu0 0.0
  %746 = vmatprep.subr.mxu0 0.0
  %747 = vmatpush1.msra.mxu0 0.0
  %748 = vmatprep.subr.mxu0 0.0
  %749 = vmatpush1.msra.mxu0 0.0
  %750 = vmatprep.mubr.f32.mxu0 0.0
  %751 = vmatmul.mubr.f32.gmra.mrb[0].mxu0 %v681
  %v752 = vpop.f32.mrb[0].mxu0
  %v753 = vadd.f32 0.0, %v752
  %v754 = vpop.f32.mrb[0].mxu0
  %v755 = vadd.f32 0.0, %v754
  %756 = vdwg.mxu0
  %757 = vmatprep.subr.mxu0 %v23
  %758 = vmatpush1.msra.mxu0 %v22
  %759 = vmatprep.subr.mxu0 %v27
  %760 = vmatpush1.msra.mxu0 %v26
  %761 = vmatprep.subr.mxu0 %v31
  %762 = vmatpush1.msra.mxu0 %v30
  %763 = vmatprep.subr.mxu0 %v35
  %764 = vmatpush1.msra.mxu0 %v34
  %765 = vmatprep.subr.mxu0 %v39
  %766 = vmatpush1.msra.mxu0 %v38
  %767 = vmatprep.subr.mxu0 %v43
  %768 = vmatpush1.msra.mxu0 %v42
  %769 = vmatprep.subr.mxu0 %v47
  %770 = vmatpush1.msra.mxu0 %v46
  %771 = vmatprep.subr.mxu0 %v51
  %772 = vmatpush1.msra.mxu0 %v50
  %773 = vmatprep.subr.mxu0 %v55
  %774 = vmatpush1.msra.mxu0 %v54
  %775 = vmatprep.subr.mxu0 %v59
  %776 = vmatpush1.msra.mxu0 %v58
  %777 = vmatprep.subr.mxu0 %v63
  %778 = vmatpush1.msra.mxu0 %v62
  %779 = vmatprep.subr.mxu0 %v67
  %780 = vmatpush1.msra.mxu0 %v66
  %781 = vmatprep.subr.mxu0 %v71
  %782 = vmatpush1.msra.mxu0 %v70
  %783 = vmatprep.subr.mxu0 %v75
  %784 = vmatpush1.msra.mxu0 %v74
  %785 = vmatprep.subr.mxu0 %v79
  %786 = vmatpush1.msra.mxu0 %v78
  %787 = vmatprep.subr.mxu0 %v83
  %788 = vmatpush1.msra.mxu0 %v82
  %789 = vmatprep.subr.mxu0 0.0
  %790 = vmatpush1.msra.mxu0 0.0
  %791 = vmatprep.subr.mxu0 0.0
  %792 = vmatpush1.msra.mxu0 0.0
  %793 = vmatprep.subr.mxu0 0.0
  %794 = vmatpush1.msra.mxu0 0.0
  %795 = vmatprep.subr.mxu0 0.0
  %796 = vmatpush1.msra.mxu0 0.0
  %797 = vmatprep.subr.mxu0 0.0
  %798 = vmatpush1.msra.mxu0 0.0
  %799 = vmatprep.subr.mxu0 0.0
  %800 = vmatpush1.msra.mxu0 0.0
  %801 = vmatprep.subr.mxu0 0.0
  %802 = vmatpush1.msra.mxu0 0.0
  %803 = vmatprep.subr.mxu0 0.0
  %804 = vmatpush1.msra.mxu0 0.0
  %805 = vmatprep.subr.mxu0 0.0
  %806 = vmatpush1.msra.mxu0 0.0
  %807 = vmatprep.subr.mxu0 0.0
  %808 = vmatpush1.msra.mxu0 0.0
  %809 = vmatprep.subr.mxu0 0.0
  %810 = vmatpush1.msra.mxu0 0.0
  %811 = vmatprep.subr.mxu0 0.0
  %812 = vmatpush1.msra.mxu0 0.0
  %813 = vmatprep.subr.mxu0 0.0
  %814 = vmatpush1.msra.mxu0 0.0
  %815 = vmatprep.subr.mxu0 0.0
  %816 = vmatpush1.msra.mxu0 0.0
  %817 = vmatprep.subr.mxu0 0.0
  %818 = vmatpush1.msra.mxu0 0.0
  %819 = vmatprep.subr.mxu0 0.0
  %820 = vmatpush1.msra.mxu0 0.0
  %821 = vmatprep.mubr.f32.mxu0 0.0
  %822 = vmatmul.mubr.f32.gmra.mrb[0].mxu0 %v681
  %v823 = vpop.f32.mrb[0].mxu0
  %v824 = vadd.f32 0.0, %v823
  %v825 = vpop.f32.mrb[0].mxu0
  %v826 = vadd.f32 0.0, %v825
  %827 = vdwg.mxu0
  %v832 = vcombine.low %v753, %v755
  %v833 = vcombine.low %v824, %v826
  %v835 = vunpack.c.l.s4 1983009808
  %v836 = vunpack.c.0.s8 %v835
  %v837 = vlaneseq
  %v838 = vshrl.u32 %v837, 7
  %v839 = vsub.s32 %v836, %v838
  %v840 = vrot.slane %v832, %v839
  %v842 = vunpack.c.l.s4 1983009808
  %v843 = vunpack.c.0.s8 %v842
  %v844 = vlaneseq
  %v845 = vshrl.u32 %v844, 7
  %v846 = vsub.s32 %v843, %v845
  %v847 = vrot.slane %v833, %v846
  %v848 = vcombine.low %v840, %v847
  %v850 = vadd.f32 %v685, %v848
  %v851 = vxor.u32 %v850, 2147483648
  %v852 = vmul.f32 %v851, 1.442695
  %v853 = vpow.pop %v852
  %v854 = vadd.f32 %v853, 1.0
  %v855 = vrcp.pop %v854
  %v856 = vmul.f32 1.0, %v855
  %v858 = vrot.slane %v850, 2
  %v860 = vxor.u32 %v858, 2147483648
  %v861 = vmul.f32 %v860, 1.442695
  %v862 = vpow.pop %v861
  %v863 = vadd.f32 %v862, 1.0
  %v864 = vrcp.pop %v863
  %v865 = vmul.f32 1.0, %v864
  %v866 = vrot.slane %v850, 4
  %v868 = vtanh.pop %v866
  %v869 = vrot.slane %v850, 6
  %v871 = vxor.u32 %v869, 2147483648
  %v872 = vmul.f32 %v871, 1.442695
  %v873 = vpow.pop %v872
  %v874 = vadd.f32 %v873, 1.0
  %v875 = vrcp.pop %v874
  %v876 = vmul.f32 1.0, %v875
  %v877 = vmul.f32 %v865, %v679
  %v878 = vmul.f32 %v856, %v868
  %v879 = vadd.f32 %v877, %v878
  %v880 = vtanh.pop %v879
  %v881 = vmul.f32 %v876, %v880
  %s882 = scalar_lea.vmem %s4, 6
  %883 = vst [vmem:[%s882] sm:$0x3] %v881
  %s884 = scalar_lea.vmem %s0, 32
  %v885 = vld [vmem:[%s884] sm:$0xff]
  %886 = vmatprep.subr.mxu0 %v21
  %887 = vmatpush1.msra.mxu0 %v20
  %888 = vmatprep.subr.mxu0 %v25
  %889 = vmatpush1.msra.mxu0 %v24
  %890 = vmatprep.subr.mxu0 %v29
  %891 = vmatpush1.msra.mxu0 %v28
  %892 = vmatprep.subr.mxu0 %v33
  %893 = vmatpush1.msra.mxu0 %v32
  %894 = vmatprep.subr.mxu0 %v37
  %895 = vmatpush1.msra.mxu0 %v36
  %896 = vmatprep.subr.mxu0 %v41
  %897 = vmatpush1.msra.mxu0 %v40
  %898 = vmatprep.subr.mxu0 %v45
  %899 = vmatpush1.msra.mxu0 %v44
  %900 = vmatprep.subr.mxu0 %v49
  %901 = vmatpush1.msra.mxu0 %v48
  %902 = vmatprep.subr.mxu0 %v53
  %903 = vmatpush1.msra.mxu0 %v52
  %904 = vmatprep.subr.mxu0 %v57
  %905 = vmatpush1.msra.mxu0 %v56
  %906 = vmatprep.subr.mxu0 %v61
  %907 = vmatpush1.msra.mxu0 %v60
  %908 = vmatprep.subr.mxu0 %v65
  %909 = vmatpush1.msra.mxu0 %v64
  %910 = vmatprep.subr.mxu0 %v69
  %911 = vmatpush1.msra.mxu0 %v68
  %912 = vmatprep.subr.mxu0 %v73
  %913 = vmatpush1.msra.mxu0 %v72
  %914 = vmatprep.subr.mxu0 %v77
  %915 = vmatpush1.msra.mxu0 %v76
  %916 = vmatprep.subr.mxu0 %v81
  %917 = vmatpush1.msra.mxu0 %v80
  %918 = vmatprep.subr.mxu0 0.0
  %919 = vmatpush1.msra.mxu0 0.0
  %920 = vmatprep.subr.mxu0 0.0
  %921 = vmatpush1.msra.mxu0 0.0
  %922 = vmatprep.subr.mxu0 0.0
  %923 = vmatpush1.msra.mxu0 0.0
  %924 = vmatprep.subr.mxu0 0.0
  %925 = vmatpush1.msra.mxu0 0.0
  %926 = vmatprep.subr.mxu0 0.0
  %927 = vmatpush1.msra.mxu0 0.0
  %928 = vmatprep.subr.mxu0 0.0
  %929 = vmatpush1.msra.mxu0 0.0
  %930 = vmatprep.subr.mxu0 0.0
  %931 = vmatpush1.msra.mxu0 0.0
  %932 = vmatprep.subr.mxu0 0.0
  %933 = vmatpush1.msra.mxu0 0.0
  %934 = vmatprep.subr.mxu0 0.0
  %935 = vmatpush1.msra.mxu0 0.0
  %936 = vmatprep.subr.mxu0 0.0
  %937 = vmatpush1.msra.mxu0 0.0
  %938 = vmatprep.subr.mxu0 0.0
  %939 = vmatpush1.msra.mxu0 0.0
  %940 = vmatprep.subr.mxu0 0.0
  %941 = vmatpush1.msra.mxu0 0.0
  %942 = vmatprep.subr.mxu0 0.0
  %943 = vmatpush1.msra.mxu0 0.0
  %944 = vmatprep.subr.mxu0 0.0
  %945 = vmatpush1.msra.mxu0 0.0
  %946 = vmatprep.subr.mxu0 0.0
  %947 = vmatpush1.msra.mxu0 0.0
  %948 = vmatprep.subr.mxu0 0.0
  %949 = vmatpush1.msra.mxu0 0.0
  %950 = vmatprep.mubr.f32.mxu0 0.0
  %951 = vmatmul.mubr.f32.gmra.mrb[0].mxu0 %v881
  %v952 = vpop.f32.mrb[0].mxu0
  %v953 = vadd.f32 0.0, %v952
  %v954 = vpop.f32.mrb[0].mxu0
  %v955 = vadd.f32 0.0, %v954
  %956 = vdwg.mxu0
  %957 = vmatprep.subr.mxu0 %v23
  %958 = vmatpush1.msra.mxu0 %v22
  %959 = vmatprep.subr.mxu0 %v27
  %960 = vmatpush1.msra.mxu0 %v26
  %961 = vmatprep.subr.mxu0 %v31
  %962 = vmatpush1.msra.mxu0 %v30
  %963 = vmatprep.subr.mxu0 %v35
  %964 = vmatpush1.msra.mxu0 %v34
  %965 = vmatprep.subr.mxu0 %v39
  %966 = vmatpush1.msra.mxu0 %v38
  %967 = vmatprep.subr.mxu0 %v43
  %968 = vmatpush1.msra.mxu0 %v42
  %969 = vmatprep.subr.mxu0 %v47
  %970 = vmatpush1.msra.mxu0 %v46
  %971 = vmatprep.subr.mxu0 %v51
  %972 = vmatpush1.msra.mxu0 %v50
  %973 = vmatprep.subr.mxu0 %v55
  %974 = vmatpush1.msra.mxu0 %v54
  %975 = vmatprep.subr.mxu0 %v59
  %976 = vmatpush1.msra.mxu0 %v58
  %977 = vmatprep.subr.mxu0 %v63
  %978 = vmatpush1.msra.mxu0 %v62
  %979 = vmatprep.subr.mxu0 %v67
  %980 = vmatpush1.msra.mxu0 %v66
  %981 = vmatprep.subr.mxu0 %v71
  %982 = vmatpush1.msra.mxu0 %v70
  %983 = vmatprep.subr.mxu0 %v75
  %984 = vmatpush1.msra.mxu0 %v74
  %985 = vmatprep.subr.mxu0 %v79
  %986 = vmatpush1.msra.mxu0 %v78
  %987 = vmatprep.subr.mxu0 %v83
  %988 = vmatpush1.msra.mxu0 %v82
  %989 = vmatprep.subr.mxu0 0.0
  %990 = vmatpush1.msra.mxu0 0.0
  %991 = vmatprep.subr.mxu0 0.0
  %992 = vmatpush1.msra.mxu0 0.0
  %993 = vmatprep.subr.mxu0 0.0
  %994 = vmatpush1.msra.mxu0 0.0
  %995 = vmatprep.subr.mxu0 0.0
  %996 = vmatpush1.msra.mxu0 0.0
  %997 = vmatprep.subr.mxu0 0.0
  %998 = vmatpush1.msra.mxu0 0.0
  %999 = vmatprep.subr.mxu0 0.0
  %1000 = vmatpush1.msra.mxu0 0.0
  %1001 = vmatprep.subr.mxu0 0.0
  %1002 = vmatpush1.msra.mxu0 0.0
  %1003 = vmatprep.subr.mxu0 0.0
  %1004 = vmatpush1.msra.mxu0 0.0
  %1005 = vmatprep.subr.mxu0 0.0
  %1006 = vmatpush1.msra.mxu0 0.0
  %1007 = vmatprep.subr.mxu0 0.0
  %1008 = vmatpush1.msra.mxu0 0.0
  %1009 = vmatprep.subr.mxu0 0.0
  %1010 = vmatpush1.msra.mxu0 0.0
  %1011 = vmatprep.subr.mxu0 0.0
  %1012 = vmatpush1.msra.mxu0 0.0
  %1013 = vmatprep.subr.mxu0 0.0
  %1014 = vmatpush1.msra.mxu0 0.0
  %1015 = vmatprep.subr.mxu0 0.0
  %1016 = vmatpush1.msra.mxu0 0.0
  %1017 = vmatprep.subr.mxu0 0.0
  %1018 = vmatpush1.msra.mxu0 0.0
  %1019 = vmatprep.subr.mxu0 0.0
  %1020 = vmatpush1.msra.mxu0 0.0
  %1021 = vmatprep.mubr.f32.mxu0 0.0
  %1022 = vmatmul.mubr.f32.gmra.mrb[0].mxu0 %v881
  %v1023 = vpop.f32.mrb[0].mxu0
  %v1024 = vadd.f32 0.0, %v1023
  %v1025 = vpop.f32.mrb[0].mxu0
  %v1026 = vadd.f32 0.0, %v1025
  %1027 = vdwg.mxu0
  %v1032 = vcombine.low %v953, %v955
  %v1033 = vcombine.low %v1024, %v1026
  %v1035 = vunpack.c.l.s4 1983009808
  %v1036 = vunpack.c.0.s8 %v1035
  %v1037 = vlaneseq
  %v1038 = vshrl.u32 %v1037, 7
  %v1039 = vsub.s32 %v1036, %v1038
  %v1040 = vrot.slane %v1032, %v1039
  %v1042 = vunpack.c.l.s4 1983009808
  %v1043 = vunpack.c.0.s8 %v1042
  %v1044 = vlaneseq
  %v1045 = vshrl.u32 %v1044, 7
  %v1046 = vsub.s32 %v1043, %v1045
  %v1047 = vrot.slane %v1033, %v1046
  %v1048 = vcombine.low %v1040, %v1047
  %v1050 = vadd.f32 %v885, %v1048
  %v1051 = vxor.u32 %v1050, 2147483648
  %v1052 = vmul.f32 %v1051, 1.442695
  %v1053 = vpow.pop %v1052
  %v1054 = vadd.f32 %v1053, 1.0
  %v1055 = vrcp.pop %v1054
  %v1056 = vmul.f32 1.0, %v1055
  %v1058 = vrot.slane %v1050, 2
  %v1060 = vxor.u32 %v1058, 2147483648
  %v1061 = vmul.f32 %v1060, 1.442695
  %v1062 = vpow.pop %v1061
  %v1063 = vadd.f32 %v1062, 1.0
  %v1064 = vrcp.pop %v1063
  %v1065 = vmul.f32 1.0, %v1064
  %v1066 = vrot.slane %v1050, 4
  %v1068 = vtanh.pop %v1066
  %v1069 = vrot.slane %v1050, 6
  %v1071 = vxor.u32 %v1069, 2147483648
  %v1072 = vmul.f32 %v1071, 1.442695
  %v1073 = vpow.pop %v1072
  %v1074 = vadd.f32 %v1073, 1.0
  %v1075 = vrcp.pop %v1074
  %v1076 = vmul.f32 1.0, %v1075
  %v1077 = vmul.f32 %v1065, %v879
  %v1078 = vmul.f32 %v1056, %v1068
  %v1079 = vadd.f32 %v1077, %v1078
  %v1080 = vtanh.pop %v1079
  %v1081 = vmul.f32 %v1076, %v1080
  %s1082 = scalar_lea.vmem %s4, 8
  %1083 = vst [vmem:[%s1082] sm:$0x3] %v1081
  %s1084 = scalar_lea.vmem %s0, 40
  %v1085 = vld [vmem:[%s1084] sm:$0xff]
  %1086 = vmatprep.subr.mxu0 %v21
  %1087 = vmatpush1.msra.mxu0 %v20
  %1088 = vmatprep.subr.mxu0 %v25
  %1089 = vmatpush1.msra.mxu0 %v24
  %1090 = vmatprep.subr.mxu0 %v29
  %1091 = vmatpush1.msra.mxu0 %v28
  %1092 = vmatprep.subr.mxu0 %v33
  %1093 = vmatpush1.msra.mxu0 %v32
  %1094 = vmatprep.subr.mxu0 %v37
  %1095 = vmatpush1.msra.mxu0 %v36
  %1096 = vmatprep.subr.mxu0 %v41
  %1097 = vmatpush1.msra.mxu0 %v40
  %1098 = vmatprep.subr.mxu0 %v45
  %1099 = vmatpush1.msra.mxu0 %v44
  %1100 = vmatprep.subr.mxu0 %v49
  %1101 = vmatpush1.msra.mxu0 %v48
  %1102 = vmatprep.subr.mxu0 %v53
  %1103 = vmatpush1.msra.mxu0 %v52
  %1104 = vmatprep.subr.mxu0 %v57
  %1105 = vmatpush1.msra.mxu0 %v56
  %1106 = vmatprep.subr.mxu0 %v61
  %1107 = vmatpush1.msra.mxu0 %v60
  %1108 = vmatprep.subr.mxu0 %v65
  %1109 = vmatpush1.msra.mxu0 %v64
  %1110 = vmatprep.subr.mxu0 %v69
  %1111 = vmatpush1.msra.mxu0 %v68
  %1112 = vmatprep.subr.mxu0 %v73
  %1113 = vmatpush1.msra.mxu0 %v72
  %1114 = vmatprep.subr.mxu0 %v77
  %1115 = vmatpush1.msra.mxu0 %v76
  %1116 = vmatprep.subr.mxu0 %v81
  %1117 = vmatpush1.msra.mxu0 %v80
  %1118 = vmatprep.subr.mxu0 0.0
  %1119 = vmatpush1.msra.mxu0 0.0
  %1120 = vmatprep.subr.mxu0 0.0
  %1121 = vmatpush1.msra.mxu0 0.0
  %1122 = vmatprep.subr.mxu0 0.0
  %1123 = vmatpush1.msra.mxu0 0.0
  %1124 = vmatprep.subr.mxu0 0.0
  %1125 = vmatpush1.msra.mxu0 0.0
  %1126 = vmatprep.subr.mxu0 0.0
  %1127 = vmatpush1.msra.mxu0 0.0
  %1128 = vmatprep.subr.mxu0 0.0
  %1129 = vmatpush1.msra.mxu0 0.0
  %1130 = vmatprep.subr.mxu0 0.0
  %1131 = vmatpush1.msra.mxu0 0.0
  %1132 = vmatprep.subr.mxu0 0.0
  %1133 = vmatpush1.msra.mxu0 0.0
  %1134 = vmatprep.subr.mxu0 0.0
  %1135 = vmatpush1.msra.mxu0 0.0
  %1136 = vmatprep.subr.mxu0 0.0
  %1137 = vmatpush1.msra.mxu0 0.0
  %1138 = vmatprep.subr.mxu0 0.0
  %1139 = vmatpush1.msra.mxu0 0.0
  %1140 = vmatprep.subr.mxu0 0.0
  %1141 = vmatpush1.msra.mxu0 0.0
  %1142 = vmatprep.subr.mxu0 0.0
  %1143 = vmatpush1.msra.mxu0 0.0
  %1144 = vmatprep.subr.mxu0 0.0
  %1145 = vmatpush1.msra.mxu0 0.0
  %1146 = vmatprep.subr.mxu0 0.0
  %1147 = vmatpush1.msra.mxu0 0.0
  %1148 = vmatprep.subr.mxu0 0.0
  %1149 = vmatpush1.msra.mxu0 0.0
  %1150 = vmatprep.mubr.f32.mxu0 0.0
  %1151 = vmatmul.mubr.f32.gmra.mrb[0].mxu0 %v1081
  %v1152 = vpop.f32.mrb[0].mxu0
  %v1153 = vadd.f32 0.0, %v1152
  %v1154 = vpop.f32.mrb[0].mxu0
  %v1155 = vadd.f32 0.0, %v1154
  %1156 = vdwg.mxu0
  %1157 = vmatprep.subr.mxu0 %v23
  %1158 = vmatpush1.msra.mxu0 %v22
  %1159 = vmatprep.subr.mxu0 %v27
  %1160 = vmatpush1.msra.mxu0 %v26
  %1161 = vmatprep.subr.mxu0 %v31
  %1162 = vmatpush1.msra.mxu0 %v30
  %1163 = vmatprep.subr.mxu0 %v35
  %1164 = vmatpush1.msra.mxu0 %v34
  %1165 = vmatprep.subr.mxu0 %v39
  %1166 = vmatpush1.msra.mxu0 %v38
  %1167 = vmatprep.subr.mxu0 %v43
  %1168 = vmatpush1.msra.mxu0 %v42
  %1169 = vmatprep.subr.mxu0 %v47
  %1170 = vmatpush1.msra.mxu0 %v46
  %1171 = vmatprep.subr.mxu0 %v51
  %1172 = vmatpush1.msra.mxu0 %v50
  %1173 = vmatprep.subr.mxu0 %v55
  %1174 = vmatpush1.msra.mxu0 %v54
  %1175 = vmatprep.subr.mxu0 %v59
  %1176 = vmatpush1.msra.mxu0 %v58
  %1177 = vmatprep.subr.mxu0 %v63
  %1178 = vmatpush1.msra.mxu0 %v62
  %1179 = vmatprep.subr.mxu0 %v67
  %1180 = vmatpush1.msra.mxu0 %v66
  %1181 = vmatprep.subr.mxu0 %v71
  %1182 = vmatpush1.msra.mxu0 %v70
  %1183 = vmatprep.subr.mxu0 %v75
  %1184 = vmatpush1.msra.mxu0 %v74
  %1185 = vmatprep.subr.mxu0 %v79
  %1186 = vmatpush1.msra.mxu0 %v78
  %1187 = vmatprep.subr.mxu0 %v83
  %1188 = vmatpush1.msra.mxu0 %v82
  %1189 = vmatprep.subr.mxu0 0.0
  %1190 = vmatpush1.msra.mxu0 0.0
  %1191 = vmatprep.subr.mxu0 0.0
  %1192 = vmatpush1.msra.mxu0 0.0
  %1193 = vmatprep.subr.mxu0 0.0
  %1194 = vmatpush1.msra.mxu0 0.0
  %1195 = vmatprep.subr.mxu0 0.0
  %1196 = vmatpush1.msra.mxu0 0.0
  %1197 = vmatprep.subr.mxu0 0.0
  %1198 = vmatpush1.msra.mxu0 0.0
  %1199 = vmatprep.subr.mxu0 0.0
  %1200 = vmatpush1.msra.mxu0 0.0
  %1201 = vmatprep.subr.mxu0 0.0
  %1202 = vmatpush1.msra.mxu0 0.0
  %1203 = vmatprep.subr.mxu0 0.0
  %1204 = vmatpush1.msra.mxu0 0.0
  %1205 = vmatprep.subr.mxu0 0.0
  %1206 = vmatpush1.msra.mxu0 0.0
  %1207 = vmatprep.subr.mxu0 0.0
  %1208 = vmatpush1.msra.mxu0 0.0
  %1209 = vmatprep.subr.mxu0 0.0
  %1210 = vmatpush1.msra.mxu0 0.0
  %1211 = vmatprep.subr.mxu0 0.0
  %1212 = vmatpush1.msra.mxu0 0.0
  %1213 = vmatprep.subr.mxu0 0.0
  %1214 = vmatpush1.msra.mxu0 0.0
  %1215 = vmatprep.subr.mxu0 0.0
  %1216 = vmatpush1.msra.mxu0 0.0
  %1217 = vmatprep.subr.mxu0 0.0
  %1218 = vmatpush1.msra.mxu0 0.0
  %1219 = vmatprep.subr.mxu0 0.0
  %1220 = vmatpush1.msra.mxu0 0.0
  %1221 = vmatprep.mubr.f32.mxu0 0.0
  %1222 = vmatmul.mubr.f32.gmra.mrb[0].mxu0 %v1081
  %v1223 = vpop.f32.mrb[0].mxu0
  %v1224 = vadd.f32 0.0, %v1223
  %v1225 = vpop.f32.mrb[0].mxu0
  %v1226 = vadd.f32 0.0, %v1225
  %1227 = vdwg.mxu0
  %v1232 = vcombine.low %v1153, %v1155
  %v1233 = vcombine.low %v1224, %v1226
  %v1235 = vunpack.c.l.s4 1983009808
  %v1236 = vunpack.c.0.s8 %v1235
  %v1237 = vlaneseq
  %v1238 = vshrl.u32 %v1237, 7
  %v1239 = vsub.s32 %v1236, %v1238
  %v1240 = vrot.slane %v1232, %v1239
  %v1242 = vunpack.c.l.s4 1983009808
  %v1243 = vunpack.c.0.s8 %v1242
  %v1244 = vlaneseq
  %v1245 = vshrl.u32 %v1244, 7
  %v1246 = vsub.s32 %v1243, %v1245
  %v1247 = vrot.slane %v1233, %v1246
  %v1248 = vcombine.low %v1240, %v1247
  %v1250 = vadd.f32 %v1085, %v1248
  %v1251 = vxor.u32 %v1250, 2147483648
  %v1252 = vmul.f32 %v1251, 1.442695
  %v1253 = vpow.pop %v1252
  %v1254 = vadd.f32 %v1253, 1.0
  %v1255 = vrcp.pop %v1254
  %v1256 = vmul.f32 1.0, %v1255
  %v1258 = vrot.slane %v1250, 2
  %v1260 = vxor.u32 %v1258, 2147483648
  %v1261 = vmul.f32 %v1260, 1.442695
  %v1262 = vpow.pop %v1261
  %v1263 = vadd.f32 %v1262, 1.0
  %v1264 = vrcp.pop %v1263
  %v1265 = vmul.f32 1.0, %v1264
  %v1266 = vrot.slane %v1250, 4
  %v1268 = vtanh.pop %v1266
  %v1269 = vrot.slane %v1250, 6
  %v1271 = vxor.u32 %v1269, 2147483648
  %v1272 = vmul.f32 %v1271, 1.442695
  %v1273 = vpow.pop %v1272
  %v1274 = vadd.f32 %v1273, 1.0
  %v1275 = vrcp.pop %v1274
  %v1276 = vmul.f32 1.0, %v1275
  %v1277 = vmul.f32 %v1265, %v1079
  %v1278 = vmul.f32 %v1256, %v1268
  %v1279 = vadd.f32 %v1277, %v1278
  %v1280 = vtanh.pop %v1279
  %v1281 = vmul.f32 %v1276, %v1280
  %s1282 = scalar_lea.vmem %s4, 10
  %1283 = vst [vmem:[%s1282] sm:$0x3] %v1281
  %s1284 = scalar_lea.vmem %s0, 48
  %v1285 = vld [vmem:[%s1284] sm:$0xff]
  %1286 = vmatprep.subr.mxu0 %v21
  %1287 = vmatpush1.msra.mxu0 %v20
  %1288 = vmatprep.subr.mxu0 %v25
  %1289 = vmatpush1.msra.mxu0 %v24
  %1290 = vmatprep.subr.mxu0 %v29
  %1291 = vmatpush1.msra.mxu0 %v28
  %1292 = vmatprep.subr.mxu0 %v33
  %1293 = vmatpush1.msra.mxu0 %v32
  %1294 = vmatprep.subr.mxu0 %v37
  %1295 = vmatpush1.msra.mxu0 %v36
  %1296 = vmatprep.subr.mxu0 %v41
  %1297 = vmatpush1.msra.mxu0 %v40
  %1298 = vmatprep.subr.mxu0 %v45
  %1299 = vmatpush1.msra.mxu0 %v44
  %1300 = vmatprep.subr.mxu0 %v49
  %1301 = vmatpush1.msra.mxu0 %v48
  %1302 = vmatprep.subr.mxu0 %v53
  %1303 = vmatpush1.msra.mxu0 %v52
  %1304 = vmatprep.subr.mxu0 %v57
  %1305 = vmatpush1.msra.mxu0 %v56
  %1306 = vmatprep.subr.mxu0 %v61
  %1307 = vmatpush1.msra.mxu0 %v60
  %1308 = vmatprep.subr.mxu0 %v65
  %1309 = vmatpush1.msra.mxu0 %v64
  %1310 = vmatprep.subr.mxu0 %v69
  %1311 = vmatpush1.msra.mxu0 %v68
  %1312 = vmatprep.subr.mxu0 %v73
  %1313 = vmatpush1.msra.mxu0 %v72
  %1314 = vmatprep.subr.mxu0 %v77
  %1315 = vmatpush1.msra.mxu0 %v76
  %1316 = vmatprep.subr.mxu0 %v81
  %1317 = vmatpush1.msra.mxu0 %v80
  %1318 = vmatprep.subr.mxu0 0.0
  %1319 = vmatpush1.msra.mxu0 0.0
  %1320 = vmatprep.subr.mxu0 0.0
  %1321 = vmatpush1.msra.mxu0 0.0
  %1322 = vmatprep.subr.mxu0 0.0
  %1323 = vmatpush1.msra.mxu0 0.0
  %1324 = vmatprep.subr.mxu0 0.0
  %1325 = vmatpush1.msra.mxu0 0.0
  %1326 = vmatprep.subr.mxu0 0.0
  %1327 = vmatpush1.msra.mxu0 0.0
  %1328 = vmatprep.subr.mxu0 0.0
  %1329 = vmatpush1.msra.mxu0 0.0
  %1330 = vmatprep.subr.mxu0 0.0
  %1331 = vmatpush1.msra.mxu0 0.0
  %1332 = vmatprep.subr.mxu0 0.0
  %1333 = vmatpush1.msra.mxu0 0.0
  %1334 = vmatprep.subr.mxu0 0.0
  %1335 = vmatpush1.msra.mxu0 0.0
  %1336 = vmatprep.subr.mxu0 0.0
  %1337 = vmatpush1.msra.mxu0 0.0
  %1338 = vmatprep.subr.mxu0 0.0
  %1339 = vmatpush1.msra.mxu0 0.0
  %1340 = vmatprep.subr.mxu0 0.0
  %1341 = vmatpush1.msra.mxu0 0.0
  %1342 = vmatprep.subr.mxu0 0.0
  %1343 = vmatpush1.msra.mxu0 0.0
  %1344 = vmatprep.subr.mxu0 0.0
  %1345 = vmatpush1.msra.mxu0 0.0
  %1346 = vmatprep.subr.mxu0 0.0
  %1347 = vmatpush1.msra.mxu0 0.0
  %1348 = vmatprep.subr.mxu0 0.0
  %1349 = vmatpush1.msra.mxu0 0.0
  %1350 = vmatprep.mubr.f32.mxu0 0.0
  %1351 = vmatmul.mubr.f32.gmra.mrb[0].mxu0 %v1281
  %v1352 = vpop.f32.mrb[0].mxu0
  %v1353 = vadd.f32 0.0, %v1352
  %v1354 = vpop.f32.mrb[0].mxu0
  %v1355 = vadd.f32 0.0, %v1354
  %1356 = vdwg.mxu0
  %1357 = vmatprep.subr.mxu0 %v23
  %1358 = vmatpush1.msra.mxu0 %v22
  %1359 = vmatprep.subr.mxu0 %v27
  %1360 = vmatpush1.msra.mxu0 %v26
  %1361 = vmatprep.subr.mxu0 %v31
  %1362 = vmatpush1.msra.mxu0 %v30
  %1363 = vmatprep.subr.mxu0 %v35
  %1364 = vmatpush1.msra.mxu0 %v34
  %1365 = vmatprep.subr.mxu0 %v39
  %1366 = vmatpush1.msra.mxu0 %v38
  %1367 = vmatprep.subr.mxu0 %v43
  %1368 = vmatpush1.msra.mxu0 %v42
  %1369 = vmatprep.subr.mxu0 %v47
  %1370 = vmatpush1.msra.mxu0 %v46
  %1371 = vmatprep.subr.mxu0 %v51
  %1372 = vmatpush1.msra.mxu0 %v50
  %1373 = vmatprep.subr.mxu0 %v55
  %1374 = vmatpush1.msra.mxu0 %v54
  %1375 = vmatprep.subr.mxu0 %v59
  %1376 = vmatpush1.msra.mxu0 %v58
  %1377 = vmatprep.subr.mxu0 %v63
  %1378 = vmatpush1.msra.mxu0 %v62
  %1379 = vmatprep.subr.mxu0 %v67
  %1380 = vmatpush1.msra.mxu0 %v66
  %1381 = vmatprep.subr.mxu0 %v71
  %1382 = vmatpush1.msra.mxu0 %v70
  %1383 = vmatprep.subr.mxu0 %v75
  %1384 = vmatpush1.msra.mxu0 %v74
  %1385 = vmatprep.subr.mxu0 %v79
  %1386 = vmatpush1.msra.mxu0 %v78
  %1387 = vmatprep.subr.mxu0 %v83
  %1388 = vmatpush1.msra.mxu0 %v82
  %1389 = vmatprep.subr.mxu0 0.0
  %1390 = vmatpush1.msra.mxu0 0.0
  %1391 = vmatprep.subr.mxu0 0.0
  %1392 = vmatpush1.msra.mxu0 0.0
  %1393 = vmatprep.subr.mxu0 0.0
  %1394 = vmatpush1.msra.mxu0 0.0
  %1395 = vmatprep.subr.mxu0 0.0
  %1396 = vmatpush1.msra.mxu0 0.0
  %1397 = vmatprep.subr.mxu0 0.0
  %1398 = vmatpush1.msra.mxu0 0.0
  %1399 = vmatprep.subr.mxu0 0.0
  %1400 = vmatpush1.msra.mxu0 0.0
  %1401 = vmatprep.subr.mxu0 0.0
  %1402 = vmatpush1.msra.mxu0 0.0
  %1403 = vmatprep.subr.mxu0 0.0
  %1404 = vmatpush1.msra.mxu0 0.0
  %1405 = vmatprep.subr.mxu0 0.0
  %1406 = vmatpush1.msra.mxu0 0.0
  %1407 = vmatprep.subr.mxu0 0.0
  %1408 = vmatpush1.msra.mxu0 0.0
  %1409 = vmatprep.subr.mxu0 0.0
  %1410 = vmatpush1.msra.mxu0 0.0
  %1411 = vmatprep.subr.mxu0 0.0
  %1412 = vmatpush1.msra.mxu0 0.0
  %1413 = vmatprep.subr.mxu0 0.0
  %1414 = vmatpush1.msra.mxu0 0.0
  %1415 = vmatprep.subr.mxu0 0.0
  %1416 = vmatpush1.msra.mxu0 0.0
  %1417 = vmatprep.subr.mxu0 0.0
  %1418 = vmatpush1.msra.mxu0 0.0
  %1419 = vmatprep.subr.mxu0 0.0
  %1420 = vmatpush1.msra.mxu0 0.0
  %1421 = vmatprep.mubr.f32.mxu0 0.0
  %1422 = vmatmul.mubr.f32.gmra.mrb[0].mxu0 %v1281
  %v1423 = vpop.f32.mrb[0].mxu0
  %v1424 = vadd.f32 0.0, %v1423
  %v1425 = vpop.f32.mrb[0].mxu0
  %v1426 = vadd.f32 0.0, %v1425
  %1427 = vdwg.mxu0
  %v1432 = vcombine.low %v1353, %v1355
  %v1433 = vcombine.low %v1424, %v1426
  %v1435 = vunpack.c.l.s4 1983009808
  %v1436 = vunpack.c.0.s8 %v1435
  %v1437 = vlaneseq
  %v1438 = vshrl.u32 %v1437, 7
  %v1439 = vsub.s32 %v1436, %v1438
  %v1440 = vrot.slane %v1432, %v1439
  %v1442 = vunpack.c.l.s4 1983009808
  %v1443 = vunpack.c.0.s8 %v1442
  %v1444 = vlaneseq
  %v1445 = vshrl.u32 %v1444, 7
  %v1446 = vsub.s32 %v1443, %v1445
  %v1447 = vrot.slane %v1433, %v1446
  %v1448 = vcombine.low %v1440, %v1447
  %v1450 = vadd.f32 %v1285, %v1448
  %v1451 = vxor.u32 %v1450, 2147483648
  %v1452 = vmul.f32 %v1451, 1.442695
  %v1453 = vpow.pop %v1452
  %v1454 = vadd.f32 %v1453, 1.0
  %v1455 = vrcp.pop %v1454
  %v1456 = vmul.f32 1.0, %v1455
  %v1458 = vrot.slane %v1450, 2
  %v1460 = vxor.u32 %v1458, 2147483648
  %v1461 = vmul.f32 %v1460, 1.442695
  %v1462 = vpow.pop %v1461
  %v1463 = vadd.f32 %v1462, 1.0
  %v1464 = vrcp.pop %v1463
  %v1465 = vmul.f32 1.0, %v1464
  %v1466 = vrot.slane %v1450, 4
  %v1468 = vtanh.pop %v1466
  %v1469 = vrot.slane %v1450, 6
  %v1471 = vxor.u32 %v1469, 2147483648
  %v1472 = vmul.f32 %v1471, 1.442695
  %v1473 = vpow.pop %v1472
  %v1474 = vadd.f32 %v1473, 1.0
  %v1475 = vrcp.pop %v1474
  %v1476 = vmul.f32 1.0, %v1475
  %v1477 = vmul.f32 %v1465, %v1279
  %v1478 = vmul.f32 %v1456, %v1468
  %v1479 = vadd.f32 %v1477, %v1478
  %v1480 = vtanh.pop %v1479
  %v1481 = vmul.f32 %v1476, %v1480
  %s1482 = scalar_lea.vmem %s4, 12
  %1483 = vst [vmem:[%s1482] sm:$0x3] %v1481
  %s1484 = scalar_lea.vmem %s0, 56
  %v1485 = vld [vmem:[%s1484] sm:$0xff]
  %1486 = vmatprep.subr.mxu0 %v21
  %1487 = vmatpush1.msra.mxu0 %v20
  %1488 = vmatprep.subr.mxu0 %v25
  %1489 = vmatpush1.msra.mxu0 %v24
  %1490 = vmatprep.subr.mxu0 %v29
  %1491 = vmatpush1.msra.mxu0 %v28
  %1492 = vmatprep.subr.mxu0 %v33
  %1493 = vmatpush1.msra.mxu0 %v32
  %1494 = vmatprep.subr.mxu0 %v37
  %1495 = vmatpush1.msra.mxu0 %v36
  %1496 = vmatprep.subr.mxu0 %v41
  %1497 = vmatpush1.msra.mxu0 %v40
  %1498 = vmatprep.subr.mxu0 %v45
  %1499 = vmatpush1.msra.mxu0 %v44
  %1500 = vmatprep.subr.mxu0 %v49
  %1501 = vmatpush1.msra.mxu0 %v48
  %1502 = vmatprep.subr.mxu0 %v53
  %1503 = vmatpush1.msra.mxu0 %v52
  %1504 = vmatprep.subr.mxu0 %v57
  %1505 = vmatpush1.msra.mxu0 %v56
  %1506 = vmatprep.subr.mxu0 %v61
  %1507 = vmatpush1.msra.mxu0 %v60
  %1508 = vmatprep.subr.mxu0 %v65
  %1509 = vmatpush1.msra.mxu0 %v64
  %1510 = vmatprep.subr.mxu0 %v69
  %1511 = vmatpush1.msra.mxu0 %v68
  %1512 = vmatprep.subr.mxu0 %v73
  %1513 = vmatpush1.msra.mxu0 %v72
  %1514 = vmatprep.subr.mxu0 %v77
  %1515 = vmatpush1.msra.mxu0 %v76
  %1516 = vmatprep.subr.mxu0 %v81
  %1517 = vmatpush1.msra.mxu0 %v80
  %1518 = vmatprep.subr.mxu0 0.0
  %1519 = vmatpush1.msra.mxu0 0.0
  %1520 = vmatprep.subr.mxu0 0.0
  %1521 = vmatpush1.msra.mxu0 0.0
  %1522 = vmatprep.subr.mxu0 0.0
  %1523 = vmatpush1.msra.mxu0 0.0
  %1524 = vmatprep.subr.mxu0 0.0
  %1525 = vmatpush1.msra.mxu0 0.0
  %1526 = vmatprep.subr.mxu0 0.0
  %1527 = vmatpush1.msra.mxu0 0.0
  %1528 = vmatprep.subr.mxu0 0.0
  %1529 = vmatpush1.msra.mxu0 0.0
  %1530 = vmatprep.subr.mxu0 0.0
  %1531 = vmatpush1.msra.mxu0 0.0
  %1532 = vmatprep.subr.mxu0 0.0
  %1533 = vmatpush1.msra.mxu0 0.0
  %1534 = vmatprep.subr.mxu0 0.0
  %1535 = vmatpush1.msra.mxu0 0.0
  %1536 = vmatprep.subr.mxu0 0.0
  %1537 = vmatpush1.msra.mxu0 0.0
  %1538 = vmatprep.subr.mxu0 0.0
  %1539 = vmatpush1.msra.mxu0 0.0
  %1540 = vmatprep.subr.mxu0 0.0
  %1541 = vmatpush1.msra.mxu0 0.0
  %1542 = vmatprep.subr.mxu0 0.0
  %1543 = vmatpush1.msra.mxu0 0.0
  %1544 = vmatprep.subr.mxu0 0.0
  %1545 = vmatpush1.msra.mxu0 0.0
  %1546 = vmatprep.subr.mxu0 0.0
  %1547 = vmatpush1.msra.mxu0 0.0
  %1548 = vmatprep.subr.mxu0 0.0
  %1549 = vmatpush1.msra.mxu0 0.0
  %1550 = vmatprep.mubr.f32.mxu0 0.0
  %1551 = vmatmul.mubr.f32.gmra.mrb[0].mxu0 %v1481
  %v1552 = vpop.f32.mrb[0].mxu0
  %v1553 = vadd.f32 0.0, %v1552
  %v1554 = vpop.f32.mrb[0].mxu0
  %v1555 = vadd.f32 0.0, %v1554
  %1556 = vdwg.mxu0
  %1557 = vmatprep.subr.mxu0 %v23
  %1558 = vmatpush1.msra.mxu0 %v22
  %1559 = vmatprep.subr.mxu0 %v27
  %1560 = vmatpush1.msra.mxu0 %v26
  %1561 = vmatprep.subr.mxu0 %v31
  %1562 = vmatpush1.msra.mxu0 %v30
  %1563 = vmatprep.subr.mxu0 %v35
  %1564 = vmatpush1.msra.mxu0 %v34
  %1565 = vmatprep.subr.mxu0 %v39
  %1566 = vmatpush1.msra.mxu0 %v38
  %1567 = vmatprep.subr.mxu0 %v43
  %1568 = vmatpush1.msra.mxu0 %v42
  %1569 = vmatprep.subr.mxu0 %v47
  %1570 = vmatpush1.msra.mxu0 %v46
  %1571 = vmatprep.subr.mxu0 %v51
  %1572 = vmatpush1.msra.mxu0 %v50
  %1573 = vmatprep.subr.mxu0 %v55
  %1574 = vmatpush1.msra.mxu0 %v54
  %1575 = vmatprep.subr.mxu0 %v59
  %1576 = vmatpush1.msra.mxu0 %v58
  %1577 = vmatprep.subr.mxu0 %v63
  %1578 = vmatpush1.msra.mxu0 %v62
  %1579 = vmatprep.subr.mxu0 %v67
  %1580 = vmatpush1.msra.mxu0 %v66
  %1581 = vmatprep.subr.mxu0 %v71
  %1582 = vmatpush1.msra.mxu0 %v70
  %1583 = vmatprep.subr.mxu0 %v75
  %1584 = vmatpush1.msra.mxu0 %v74
  %1585 = vmatprep.subr.mxu0 %v79
  %1586 = vmatpush1.msra.mxu0 %v78
  %1587 = vmatprep.subr.mxu0 %v83
  %1588 = vmatpush1.msra.mxu0 %v82
  %1589 = vmatprep.subr.mxu0 0.0
  %1590 = vmatpush1.msra.mxu0 0.0
  %1591 = vmatprep.subr.mxu0 0.0
  %1592 = vmatpush1.msra.mxu0 0.0
  %1593 = vmatprep.subr.mxu0 0.0
  %1594 = vmatpush1.msra.mxu0 0.0
  %1595 = vmatprep.subr.mxu0 0.0
  %1596 = vmatpush1.msra.mxu0 0.0
  %1597 = vmatprep.subr.mxu0 0.0
  %1598 = vmatpush1.msra.mxu0 0.0
  %1599 = vmatprep.subr.mxu0 0.0
  %1600 = vmatpush1.msra.mxu0 0.0
  %1601 = vmatprep.subr.mxu0 0.0
  %1602 = vmatpush1.msra.mxu0 0.0
  %1603 = vmatprep.subr.mxu0 0.0
  %1604 = vmatpush1.msra.mxu0 0.0
  %1605 = vmatprep.subr.mxu0 0.0
  %1606 = vmatpush1.msra.mxu0 0.0
  %1607 = vmatprep.subr.mxu0 0.0
  %1608 = vmatpush1.msra.mxu0 0.0
  %1609 = vmatprep.subr.mxu0 0.0
  %1610 = vmatpush1.msra.mxu0 0.0
  %1611 = vmatprep.subr.mxu0 0.0
  %1612 = vmatpush1.msra.mxu0 0.0
  %1613 = vmatprep.subr.mxu0 0.0
  %1614 = vmatpush1.msra.mxu0 0.0
  %1615 = vmatprep.subr.mxu0 0.0
  %1616 = vmatpush1.msra.mxu0 0.0
  %1617 = vmatprep.subr.mxu0 0.0
  %1618 = vmatpush1.msra.mxu0 0.0
  %1619 = vmatprep.subr.mxu0 0.0
  %1620 = vmatpush1.msra.mxu0 0.0
  %1621 = vmatprep.mubr.f32.mxu0 0.0
  %1622 = vmatmul.mubr.f32.gmra.mrb[0].mxu0 %v1481
  %v1623 = vpop.f32.mrb[0].mxu0
  %v1624 = vadd.f32 0.0, %v1623
  %v1625 = vpop.f32.mrb[0].mxu0
  %v1626 = vadd.f32 0.0, %v1625
  %1627 = vdwg.mxu0
  %v1632 = vcombine.low %v1553, %v1555
  %v1633 = vcombine.low %v1624, %v1626
  %v1635 = vunpack.c.l.s4 1983009808
  %v1636 = vunpack.c.0.s8 %v1635
  %v1637 = vlaneseq
  %v1638 = vshrl.u32 %v1637, 7
  %v1639 = vsub.s32 %v1636, %v1638
  %v1640 = vrot.slane %v1632, %v1639
  %v1642 = vunpack.c.l.s4 1983009808
  %v1643 = vunpack.c.0.s8 %v1642
  %v1644 = vlaneseq
  %v1645 = vshrl.u32 %v1644, 7
  %v1646 = vsub.s32 %v1643, %v1645
  %v1647 = vrot.slane %v1633, %v1646
  %v1648 = vcombine.low %v1640, %v1647
  %v1650 = vadd.f32 %v1485, %v1648
  %v1651 = vxor.u32 %v1650, 2147483648
  %v1652 = vmul.f32 %v1651, 1.442695
  %v1653 = vpow.pop %v1652
  %v1654 = vadd.f32 %v1653, 1.0
  %v1655 = vrcp.pop %v1654
  %v1656 = vmul.f32 1.0, %v1655
  %v1658 = vrot.slane %v1650, 2
  %v1660 = vxor.u32 %v1658, 2147483648
  %v1661 = vmul.f32 %v1660, 1.442695
  %v1662 = vpow.pop %v1661
  %v1663 = vadd.f32 %v1662, 1.0
  %v1664 = vrcp.pop %v1663
  %v1665 = vmul.f32 1.0, %v1664
  %v1666 = vrot.slane %v1650, 4
  %v1668 = vtanh.pop %v1666
  %v1669 = vrot.slane %v1650, 6
  %v1671 = vxor.u32 %v1669, 2147483648
  %v1672 = vmul.f32 %v1671, 1.442695
  %v1673 = vpow.pop %v1672
  %v1674 = vadd.f32 %v1673, 1.0
  %v1675 = vrcp.pop %v1674
  %v1676 = vmul.f32 1.0, %v1675
  %v1677 = vmul.f32 %v1665, %v1479
  %v1678 = vmul.f32 %v1656, %v1668
  %v1679 = vadd.f32 %v1677, %v1678
  %v1680 = vtanh.pop %v1679
  %v1681 = vmul.f32 %v1676, %v1680
  %s1682 = scalar_lea.vmem %s4, 14
  %1683 = vst [vmem:[%s1682] sm:$0x3] %v1681
  %1684 = vst [vmem:[%s5] sm:$0x3] %v1681
  %1685 = vst [vmem:[%s6] sm:$0x3] %v1679
  // Predicated region
  $region18: #{lstm_forward.4} parent=0 // pred_check
    _
  $region19: #{lstm_forward.4} parent=0 // pred_check_branch
    %1687 = sbr.rel (0) target = $region21
  $region20: #{lstm_forward.4} parent=0 // pred_region
    _
  $region21: #{lstm_forward.4} parent=0 // pred_fallthru
    _
  // Predicated region
  $region22: #{lstm_forward.4} parent=0 // pred_check
    _
  $region23: #{lstm_forward.4} parent=0 // pred_check_branch
    %1689 = sbr.rel (0) target = $region25
  $region24: #{lstm_forward.4} parent=0 // pred_region
    _
  $region25: #{lstm_forward.4} parent=0 // pred_fallthru
    _
  // Predicated region
  $region26: #{lstm_forward.4} parent=0 // pred_check
    _
  $region27: #{lstm_forward.4} parent=0 // pred_check_branch
    %1691 = sbr.rel (0) target = $region29
  $region28: #{lstm_forward.4} parent=0 // pred_region
    _
  $region29: #{lstm_forward.4} parent=0 // pred_fallthru
    _
  // Predicated region
  $region30: #{lstm_forward.4} parent=0 // pred_check
    _
  $region31: #{lstm_forward.4} parent=0 // pred_check_branch
    %1693 = sbr.rel (0) target = $region33
  $region32: #{lstm_forward.4} parent=0 // pred_region
    _
  $region33: #{lstm_forward.4} parent=0 // pred_fallthru
    _
  // Predicated region
  $region34: #{lstm_forward.4} parent=0 // pred_check
    _
  $region35: #{lstm_forward.4} parent=0 // pred_check_branch
    %1695 = sbr.rel (0) target = $region37
  $region36: #{lstm_forward.4} parent=0 // pred_region
    _
  $region37: #{lstm_forward.4} parent=0 // pred_fallthru
    _
  // Predicated region
  $region38: #{lstm_forward.4} parent=0 // pred_check
    _
  $region39: #{lstm_forward.4} parent=0 // pred_check_branch
    %1697 = sbr.rel (0) target = $region41
  $region40: #{lstm_forward.4} parent=0 // pred_region
    _
  $region41: #{lstm_forward.4} parent=0 // pred_fallthru
    _

</llo_original>
